<compile_context>
chip_gen: v5e
topology: v5e:2x2
jax: 0.10.0
libtpu: 0.0.40
codegen_flags: <defaults>
</compile_context>

<pallas_src>
import functools

import numpy as np
import jax
import jax.numpy as jnp
from jax import lax
from jax.experimental import pallas as pl
from jax.experimental.pallas import tpu as pltpu

# Model / test configuration (phi='B': kernel 7, depthwise groups=C, 16 GN groups)
B, C, H, W = 2, 32, 16, 16          # C must be divisible by NUM_GROUPS (16)
K = 7
PAD = K // 2
NUM_GROUPS = 16
EPS = 1e-5                           # nn.GroupNorm default eps


@functools.lru_cache(maxsize=None)
def _ela_constants(b, c, h, w, num_groups):
    """Host-precomputed constant matrices (built once per shape, numpy)."""
    hw, L, bc = h * w, h + w, b * c
    cpg = c // num_groups
    l = np.arange(hw)
    jh = np.arange(h)
    jw = np.arange(w)

    # Reduction matrix: (hw, L).  x2 @ red = [mean over W | mean over H].
    red_h = (l[:, None] // w == jh[None, :]).astype(np.float32) / float(w)   # (hw, h)
    red_w = (l[:, None] % w == jw[None, :]).astype(np.float32) / float(h)    # (hw, w)
    red = np.concatenate([red_h, red_w], axis=1)                             # (hw, L)

    # Fused expansion matrix: (L, 2*hw).
    #   a @ exp_cat -> [ a_h[l // w]  |  a_w[l % w] ]  (two 256-lane halves)
    exp_h = np.zeros((L, hw), np.float32)
    exp_h[:h, :] = (jh[:, None] == (l[None, :] // w)).astype(np.float32)
    exp_w = np.zeros((L, hw), np.float32)
    exp_w[h:, :] = (jw[:, None] == (l[None, :] % w)).astype(np.float32)
    exp_cat = np.concatenate([exp_h, exp_w], axis=1)                         # (L, 2*hw)

    # GroupNorm group projector: (bc, bc).  Rows are b*C + c; row // cpg indexes
    # (batch, group) so batch boundaries are respected automatically.
    r = np.arange(bc)
    grp = ((r[:, None] // cpg) == (r[None, :] // cpg)).astype(np.float32)    # (bc, bc)

    return jnp.asarray(red), jnp.asarray(exp_cat), jnp.asarray(grp)


def ela_forward(x, conv_w, gamma, beta, *, num_groups=NUM_GROUPS, eps=EPS):
    b, c, h, w = x.shape
    hw = h * w                       # lane-dense spatial axis (256)
    L = h + w                        # fused branch axis: [h-branch | w-branch]
    bc = b * c
    cpg = c // num_groups            # channels per GroupNorm group
    k_size = conv_w.shape[-1]
    pad = k_size // 2

    red, exp_cat, grp = _ela_constants(b, c, h, w, num_groups)

    # --- host-side prep (all tiny / free) ---
    x2 = x.reshape(bc, hw)                                                   # contiguous reshape, free
    w_t = jnp.tile(conv_w.reshape(c, k_size).astype(jnp.float32), (b, 1))    # (bc, K)
    gamma_t = jnp.tile(gamma.reshape(c, 1).astype(jnp.float32), (b, 1))      # (bc, 1)
    beta_t = jnp.tile(beta.reshape(c, 1).astype(jnp.float32), (b, 1))        # (bc, 1)

    inv_gh = 1.0 / (cpg * h)         # GN normalizers (group has cpg rows per segment)
    inv_gw = 1.0 / (cpg * w)

    def kernel(x_ref, red_ref, exp_ref, grp_ref, w_ref, g_ref, b_ref, o_ref):
        f32 = jnp.float32
        x_blk = x_ref[...].astype(f32)                       # (bc, hw); no-op cast for f32 input

        # Tiny lane-index bookkeeping (only (1, L) ints — negligible VPU work).
        lane = lax.broadcasted_iota(jnp.int32, (1, L), 1)
        in_h = lane < h                                      # h-segment mask
        local = jnp.where(in_h, lane, lane - h)              # position inside segment
        seg_len = jnp.where(in_h, h, w)

        # ---- 1) fused per-axis means via a single MXU reduction (host RHS) ----
        # NOTE: default MXU precision already matches the f32 reference here;
        # pin precision=HIGHEST if bit-level parity is ever required.
        y = jnp.dot(x_blk, red_ref[...], preferred_element_type=f32)         # (bc, L)

        # ---- 2) shared depthwise Conv1d (zero pad) on both segments at once ----
        acc = w_ref[:, pad:pad + 1] * y                      # shift-0 term
        for kk in range(k_size):                             # static unroll (K=7)
            s = kk - pad
            if s == 0:
                continue
            rolled = pltpu.roll(y, shift=(-s) % L, axis=1)   # rolled[:, l] = y[:, (l+s) % L]
            valid = jnp.logical_and(local + s >= 0, local + s < seg_len)     # no cross-segment leak
            acc = acc + w_ref[:, kk:kk + 1] * jnp.where(valid, rolled, 0.0)
        y = acc                                              # (bc, L)

        # ---- 3) shared GroupNorm (one-pass variance) + sigmoid ----
        # Exact masked lane reductions for per-row segment sums (XLU), then two
        # independent group matmuls on the lane-broadcast forms — no tiny-N
        # matmuls and no serial mean->center->square chain.
        y2 = y * y
        zero = jnp.zeros_like(y)
        s_h = jnp.sum(jnp.where(in_h, y, zero), axis=1, keepdims=True)       # (bc, 1)
        s_w = jnp.sum(jnp.where(in_h, zero, y), axis=1, keepdims=True)
        q_h = jnp.sum(jnp.where(in_h, y2, zero), axis=1, keepdims=True)
        q_w = jnp.sum(jnp.where(in_h, zero, y2), axis=1, keepdims=True)
        mean_local = jnp.where(in_h, s_h * inv_gh, s_w * inv_gw)             # (bc, L)
        ey2_local = jnp.where(in_h, q_h * inv_gh, q_w * inv_gw)              # (bc, L)
        gmean = jnp.dot(grp_ref[...], mean_local, preferred_element_type=f32)  # (bc, L)
        gey2 = jnp.dot(grp_ref[...], ey2_local, preferred_element_type=f32)    # (bc, L)
        var = jnp.maximum(gey2 - gmean * gmean, 0.0)         # one-pass (biased) variance
        a = jax.nn.sigmoid((y - gmean) * lax.rsqrt(var + eps)
                           * g_ref[...] + b_ref[...])        # (bc, L)

        # ---- 4) single fused expansion matmul, then modulate the input ----
        att2 = jnp.dot(a, exp_ref[...], preferred_element_type=f32)          # (bc, 2*hw)
        attn = att2[:, :hw] * att2[:, hw:]                   # lane-aligned 256-wide halves
        o_ref[...] = (x_blk * attn).astype(o_ref.dtype)

    # Advisory cost hint for XLA scheduling around the custom call.
    flops = (2 * bc * hw * L                 # reduction matmul
             + 2 * 2 * bc * bc * L           # two group matmuls
             + 2 * bc * L * 2 * hw           # fused expansion matmul
             + 2 * bc * L * k_size           # conv
             + 4 * bc * hw)                  # elementwise modulate
    bytes_accessed = 4 * (2 * bc * hw + hw * L + L * 2 * hw + bc * bc + bc * (k_size + 2))

    out2 = pl.pallas_call(
        kernel,
        out_shape=jax.ShapeDtypeStruct((bc, hw), x.dtype),
        grid=(1,),                                            # single step: whole problem resident
        in_specs=[
            pl.BlockSpec((bc, hw), lambda i: (0, 0)),         # x, lane-dense (64, 256)
            pl.BlockSpec((hw, L), lambda i: (0, 0)),          # reduction matrix (host const)
            pl.BlockSpec((L, 2 * hw), lambda i: (0, 0)),      # fused expansion matrix (host const)
            pl.BlockSpec((bc, bc), lambda i: (0, 0)),         # GN group projector (host const)
            pl.BlockSpec((bc, k_size), lambda i: (0, 0)),     # depthwise conv weight (tiled per batch)
            pl.BlockSpec((bc, 1), lambda i: (0, 0)),          # GN gamma (tiled per batch)
            pl.BlockSpec((bc, 1), lambda i: (0, 0)),          # GN beta  (tiled per batch)
        ],
        out_specs=pl.BlockSpec((bc, hw), lambda i: (0, 0)),
        compiler_params=pltpu.CompilerParams(
            dimension_semantics=("arbitrary",),
            vmem_limit_bytes=32 * 1024 * 1024),               # explicit; safe on v5e/v6e/v7x
        cost_estimate=pl.CostEstimate(
            flops=int(flops), transcendentals=int(2 * bc * L),
            bytes_accessed=int(bytes_accessed)),
    )(x2, red, exp_cat, grp, w_t, gamma_t, beta_t)
    # TODO(synk): for production-sized bc, grid over the bc axis in cpg-multiple
    # blocks marked "parallel" (v7x dual-TC) instead of the single resident step.
    return out2.reshape(b, c, h, w)


# ---------------- pure-JAX reference (for correctness check) ----------------
def ela_ref(x, conv_w, gamma, beta):
    b, c, h, w = x.shape
    x_h = jnp.mean(x, axis=3)                                 # (b, c, h)
    x_w = jnp.mean(x, axis=2)                                 # (b, c, w)

    def dwconv(v):                                            # (b, c, L)
        L = v.shape[-1]
        vpad = jnp.pad(v, ((0, 0), (0, 0), (PAD, PAD)))
        out = jnp.zeros_like(v)
        for k in range(K):
            out = out + conv_w[None, :, k][..., None] * vpad[:, :, k:k + L]
        return out

    def gn_sig(v):                                            # (b, c, L)
        L = v.shape[-1]
        vg = v.reshape(b, NUM_GROUPS, c // NUM_GROUPS, L)
        mean = vg.mean(axis=(2, 3), keepdims=True)
        var = vg.var(axis=(2, 3), keepdims=True)
        vn = ((vg - mean) / jnp.sqrt(var + EPS)).reshape(b, c, L)
        return jax.nn.sigmoid(vn * gamma[None, :, None] + beta[None, :, None])

    a_h = gn_sig(dwconv(x_h))
    a_w = gn_sig(dwconv(x_w))
    return a_h[:, :, :, None] * a_w[:, :, None, :] * x


if __name__ == "__main__":
    key = jax.random.PRNGKey(0)
    k1, k2, k3, k4 = jax.random.split(key, 4)
    x = jax.random.normal(k1, (B, C, H, W), dtype=jnp.float32)
    # Deterministic synthetic parameters (shapes from the module's __init__):
    #   Conv1d(C, C, k=7, groups=C, bias=False) -> weight (C, 1, 7), stored here as (C, 7)
    #   GroupNorm(16, C) -> gamma (C,), beta (C,)
    conv_w = 0.1 * jax.random.normal(k2, (C, K), dtype=jnp.float32)
    gamma = 1.0 + 0.1 * jax.random.normal(k3, (C,), dtype=jnp.float32)
    beta = 0.1 * jax.random.normal(k4, (C,), dtype=jnp.float32)

    out = ela_forward(x, conv_w, gamma, beta)
    out = jax.block_until_ready(out)

    ref = ela_ref(x, conv_w, gamma, beta)
    assert jnp.allclose(out, ref, atol=1e-5, rtol=1e-5), float(jnp.max(jnp.abs(out - ref)))
    print("KERNEL_OK")
</pallas_src>

<mosaic_0001>
module attributes {stable_mosaic.version = 11 : i64} {
  func.func @kernel(%arg0: i32, %arg1: memref<64x256xf32, #tpu.memory_space<vmem>>, %arg2: memref<256x32xf32, #tpu.memory_space<vmem>>, %arg3: memref<32x512xf32, #tpu.memory_space<vmem>>, %arg4: memref<64x64xf32, #tpu.memory_space<vmem>>, %arg5: memref<64x7xf32, #tpu.memory_space<vmem>>, %arg6: memref<64x1xf32, #tpu.memory_space<vmem>>, %arg7: memref<64x1xf32, #tpu.memory_space<vmem>>, %arg8: memref<64x256xf32, #tpu.memory_space<vmem>>) attributes {dimension_semantics = [#tpu.dimension_semantics<arbitrary>], iteration_bounds = array<i64: 1>, scalar_prefetch = 0 : i64, scratch_operands = 0 : i64, tpu.core_type = #tpu.core_type<tc>, window_params = [{pipeline_mode = #tpu.pipeline_mode<synchronous>, transform_indices = @transform_0, window_bounds = array<i64: 64, 256>}, {pipeline_mode = #tpu.pipeline_mode<synchronous>, transform_indices = @transform_1, window_bounds = array<i64: 256, 32>}, {pipeline_mode = #tpu.pipeline_mode<synchronous>, transform_indices = @transform_2, window_bounds = array<i64: 32, 512>}, {pipeline_mode = #tpu.pipeline_mode<synchronous>, transform_indices = @transform_3, window_bounds = array<i64: 64, 64>}, {pipeline_mode = #tpu.pipeline_mode<synchronous>, transform_indices = @transform_4, window_bounds = array<i64: 64, 7>}, {pipeline_mode = #tpu.pipeline_mode<synchronous>, transform_indices = @transform_5, window_bounds = array<i64: 64, 1>}, {pipeline_mode = #tpu.pipeline_mode<synchronous>, transform_indices = @transform_6, window_bounds = array<i64: 64, 1>}, {pipeline_mode = #tpu.pipeline_mode<synchronous>, transform_indices = @transform_7, window_bounds = array<i64: 64, 256>}]} {
    %c0 = arith.constant 0 : index
    %c0_0 = arith.constant 0 : index
    %0 = vector.load %arg1[%c0, %c0_0] : memref<64x256xf32, #tpu.memory_space<vmem>>, vector<64x256xf32>
    %1 = tpu.iota {dimensions = array<i32: 1>} : vector<1x32xi32>
    %c16_i32 = arith.constant 16 : i32
    %2 = vector.broadcast %c16_i32 : i32 to vector<1x32xi32>
    %3 = arith.cmpi slt, %1, %2 : vector<1x32xi32>
    %c16_i32_1 = arith.constant 16 : i32
    %4 = vector.broadcast %c16_i32_1 : i32 to vector<1x32xi32>
    %5 = arith.subi %1, %4 : vector<1x32xi32>
    %6 = arith.select %3, %1, %5 : vector<1x32xi1>, vector<1x32xi32>
    %c16_i32_2 = arith.constant 16 : i32
    %c16_i32_3 = arith.constant 16 : i32
    %7 = vector.broadcast %c16_i32_2 : i32 to vector<1x32xi32>
    %8 = vector.broadcast %c16_i32_3 : i32 to vector<1x32xi32>
    %9 = arith.select %3, %7, %8 : vector<1x32xi1>, vector<1x32xi32>
    %c0_4 = arith.constant 0 : index
    %c0_5 = arith.constant 0 : index
    %10 = vector.load %arg2[%c0_4, %c0_5] : memref<256x32xf32, #tpu.memory_space<vmem>>, vector<256x32xf32>
    %cst = arith.constant dense<0.000000e+00> : vector<64x32xf32>
    %11 = tpu.matmul %0, %10, %cst {dimension_numbers = #tpu.dot_dimension_numbers<[1], [0], [0], [1], [0, 0, 1, 1], [], []>} : vector<64x256xf32>, vector<256x32xf32>, vector<64x32xf32> -> vector<64x32xf32>
    %c0_6 = arith.constant 0 : index
    %c3 = arith.constant 3 : index
    %12 = vector.load %arg5[%c0_6, %c3] : memref<64x7xf32, #tpu.memory_space<vmem>>, vector<64x1xf32>
    %13 = vector.broadcast %12 : vector<64x1xf32> to vector<64x32xf32>
    %14 = arith.mulf %13, %11 : vector<64x32xf32>
    %c3_i32 = arith.constant 3 : i32
    %15 = tpu.dynamic_rotate %11 by %c3_i32 dim 1 : vector<64x32xf32>, i32 -> vector<64x32xf32>
    %c-3_i32 = arith.constant -3 : i32
    %16 = vector.broadcast %c-3_i32 : i32 to vector<1x32xi32>
    %17 = arith.addi %6, %16 : vector<1x32xi32>
    %c0_i32 = arith.constant 0 : i32
    %18 = vector.broadcast %c0_i32 : i32 to vector<1x32xi32>
    %19 = arith.cmpi sge, %17, %18 : vector<1x32xi32>
    %c-3_i32_7 = arith.constant -3 : i32
    %20 = vector.broadcast %c-3_i32_7 : i32 to vector<1x32xi32>
    %21 = arith.addi %6, %20 : vector<1x32xi32>
    %22 = arith.cmpi slt, %21, %9 : vector<1x32xi32>
    %23 = arith.andi %19, %22 : vector<1x32xi1>
    %c0_8 = arith.constant 0 : index
    %c0_9 = arith.constant 0 : index
    %24 = vector.load %arg5[%c0_8, %c0_9] : memref<64x7xf32, #tpu.memory_space<vmem>>, vector<64x1xf32>
    %cst_10 = arith.constant 0.000000e+00 : f32
    %25 = vector.shape_cast %23 : vector<1x32xi1> to vector<1x32xi1>
    %26 = vector.broadcast %25 : vector<1x32xi1> to vector<64x32xi1>
    %27 = vector.broadcast %cst_10 : f32 to vector<64x32xf32>
    %28 = arith.select %26, %15, %27 : vector<64x32xi1>, vector<64x32xf32>
    %29 = vector.broadcast %24 : vector<64x1xf32> to vector<64x32xf32>
    %30 = arith.mulf %29, %28 : vector<64x32xf32>
    %31 = arith.addf %14, %30 : vector<64x32xf32>
    %c2_i32 = arith.constant 2 : i32
    %32 = tpu.dynamic_rotate %11 by %c2_i32 dim 1 : vector<64x32xf32>, i32 -> vector<64x32xf32>
    %c-2_i32 = arith.constant -2 : i32
    %33 = vector.broadcast %c-2_i32 : i32 to vector<1x32xi32>
    %34 = arith.addi %6, %33 : vector<1x32xi32>
    %c0_i32_11 = arith.constant 0 : i32
    %35 = vector.broadcast %c0_i32_11 : i32 to vector<1x32xi32>
    %36 = arith.cmpi sge, %34, %35 : vector<1x32xi32>
    %c-2_i32_12 = arith.constant -2 : i32
    %37 = vector.broadcast %c-2_i32_12 : i32 to vector<1x32xi32>
    %38 = arith.addi %6, %37 : vector<1x32xi32>
    %39 = arith.cmpi slt, %38, %9 : vector<1x32xi32>
    %40 = arith.andi %36, %39 : vector<1x32xi1>
    %c0_13 = arith.constant 0 : index
    %c1 = arith.constant 1 : index
    %41 = vector.load %arg5[%c0_13, %c1] : memref<64x7xf32, #tpu.memory_space<vmem>>, vector<64x1xf32>
    %cst_14 = arith.constant 0.000000e+00 : f32
    %42 = vector.shape_cast %40 : vector<1x32xi1> to vector<1x32xi1>
    %43 = vector.broadcast %42 : vector<1x32xi1> to vector<64x32xi1>
    %44 = vector.broadcast %cst_14 : f32 to vector<64x32xf32>
    %45 = arith.select %43, %32, %44 : vector<64x32xi1>, vector<64x32xf32>
    %46 = vector.broadcast %41 : vector<64x1xf32> to vector<64x32xf32>
    %47 = arith.mulf %46, %45 : vector<64x32xf32>
    %48 = arith.addf %31, %47 : vector<64x32xf32>
    %c1_i32 = arith.constant 1 : i32
    %49 = tpu.dynamic_rotate %11 by %c1_i32 dim 1 : vector<64x32xf32>, i32 -> vector<64x32xf32>
    %c-1_i32 = arith.constant -1 : i32
    %50 = vector.broadcast %c-1_i32 : i32 to vector<1x32xi32>
    %51 = arith.addi %6, %50 : vector<1x32xi32>
    %c0_i32_15 = arith.constant 0 : i32
    %52 = vector.broadcast %c0_i32_15 : i32 to vector<1x32xi32>
    %53 = arith.cmpi sge, %51, %52 : vector<1x32xi32>
    %c-1_i32_16 = arith.constant -1 : i32
    %54 = vector.broadcast %c-1_i32_16 : i32 to vector<1x32xi32>
    %55 = arith.addi %6, %54 : vector<1x32xi32>
    %56 = arith.cmpi slt, %55, %9 : vector<1x32xi32>
    %57 = arith.andi %53, %56 : vector<1x32xi1>
    %c0_17 = arith.constant 0 : index
    %c2 = arith.constant 2 : index
    %58 = vector.load %arg5[%c0_17, %c2] : memref<64x7xf32, #tpu.memory_space<vmem>>, vector<64x1xf32>
    %cst_18 = arith.constant 0.000000e+00 : f32
    %59 = vector.shape_cast %57 : vector<1x32xi1> to vector<1x32xi1>
    %60 = vector.broadcast %59 : vector<1x32xi1> to vector<64x32xi1>
    %61 = vector.broadcast %cst_18 : f32 to vector<64x32xf32>
    %62 = arith.select %60, %49, %61 : vector<64x32xi1>, vector<64x32xf32>
    %63 = vector.broadcast %58 : vector<64x1xf32> to vector<64x32xf32>
    %64 = arith.mulf %63, %62 : vector<64x32xf32>
    %65 = arith.addf %48, %64 : vector<64x32xf32>
    %c31_i32 = arith.constant 31 : i32
    %66 = tpu.dynamic_rotate %11 by %c31_i32 dim 1 : vector<64x32xf32>, i32 -> vector<64x32xf32>
    %c1_i32_19 = arith.constant 1 : i32
    %67 = vector.broadcast %c1_i32_19 : i32 to vector<1x32xi32>
    %68 = arith.addi %6, %67 : vector<1x32xi32>
    %c0_i32_20 = arith.constant 0 : i32
    %69 = vector.broadcast %c0_i32_20 : i32 to vector<1x32xi32>
    %70 = arith.cmpi sge, %68, %69 : vector<1x32xi32>
    %c1_i32_21 = arith.constant 1 : i32
    %71 = vector.broadcast %c1_i32_21 : i32 to vector<1x32xi32>
    %72 = arith.addi %6, %71 : vector<1x32xi32>
    %73 = arith.cmpi slt, %72, %9 : vector<1x32xi32>
    %74 = arith.andi %70, %73 : vector<1x32xi1>
    %c0_22 = arith.constant 0 : index
    %c4 = arith.constant 4 : index
    %75 = vector.load %arg5[%c0_22, %c4] : memref<64x7xf32, #tpu.memory_space<vmem>>, vector<64x1xf32>
    %cst_23 = arith.constant 0.000000e+00 : f32
    %76 = vector.shape_cast %74 : vector<1x32xi1> to vector<1x32xi1>
    %77 = vector.broadcast %76 : vector<1x32xi1> to vector<64x32xi1>
    %78 = vector.broadcast %cst_23 : f32 to vector<64x32xf32>
    %79 = arith.select %77, %66, %78 : vector<64x32xi1>, vector<64x32xf32>
    %80 = vector.broadcast %75 : vector<64x1xf32> to vector<64x32xf32>
    %81 = arith.mulf %80, %79 : vector<64x32xf32>
    %82 = arith.addf %65, %81 : vector<64x32xf32>
    %c30_i32 = arith.constant 30 : i32
    %83 = tpu.dynamic_rotate %11 by %c30_i32 dim 1 : vector<64x32xf32>, i32 -> vector<64x32xf32>
    %c2_i32_24 = arith.constant 2 : i32
    %84 = vector.broadcast %c2_i32_24 : i32 to vector<1x32xi32>
    %85 = arith.addi %6, %84 : vector<1x32xi32>
    %c0_i32_25 = arith.constant 0 : i32
    %86 = vector.broadcast %c0_i32_25 : i32 to vector<1x32xi32>
    %87 = arith.cmpi sge, %85, %86 : vector<1x32xi32>
    %c2_i32_26 = arith.constant 2 : i32
    %88 = vector.broadcast %c2_i32_26 : i32 to vector<1x32xi32>
    %89 = arith.addi %6, %88 : vector<1x32xi32>
    %90 = arith.cmpi slt, %89, %9 : vector<1x32xi32>
    %91 = arith.andi %87, %90 : vector<1x32xi1>
    %c0_27 = arith.constant 0 : index
    %c5 = arith.constant 5 : index
    %92 = vector.load %arg5[%c0_27, %c5] : memref<64x7xf32, #tpu.memory_space<vmem>>, vector<64x1xf32>
    %cst_28 = arith.constant 0.000000e+00 : f32
    %93 = vector.shape_cast %91 : vector<1x32xi1> to vector<1x32xi1>
    %94 = vector.broadcast %93 : vector<1x32xi1> to vector<64x32xi1>
    %95 = vector.broadcast %cst_28 : f32 to vector<64x32xf32>
    %96 = arith.select %94, %83, %95 : vector<64x32xi1>, vector<64x32xf32>
    %97 = vector.broadcast %92 : vector<64x1xf32> to vector<64x32xf32>
    %98 = arith.mulf %97, %96 : vector<64x32xf32>
    %99 = arith.addf %82, %98 : vector<64x32xf32>
    %c29_i32 = arith.constant 29 : i32
    %100 = tpu.dynamic_rotate %11 by %c29_i32 dim 1 : vector<64x32xf32>, i32 -> vector<64x32xf32>
    %c3_i32_29 = arith.constant 3 : i32
    %101 = vector.broadcast %c3_i32_29 : i32 to vector<1x32xi32>
    %102 = arith.addi %6, %101 : vector<1x32xi32>
    %c0_i32_30 = arith.constant 0 : i32
    %103 = vector.broadcast %c0_i32_30 : i32 to vector<1x32xi32>
    %104 = arith.cmpi sge, %102, %103 : vector<1x32xi32>
    %c3_i32_31 = arith.constant 3 : i32
    %105 = vector.broadcast %c3_i32_31 : i32 to vector<1x32xi32>
    %106 = arith.addi %6, %105 : vector<1x32xi32>
    %107 = arith.cmpi slt, %106, %9 : vector<1x32xi32>
    %108 = arith.andi %104, %107 : vector<1x32xi1>
    %c0_32 = arith.constant 0 : index
    %c6 = arith.constant 6 : index
    %109 = vector.load %arg5[%c0_32, %c6] : memref<64x7xf32, #tpu.memory_space<vmem>>, vector<64x1xf32>
    %cst_33 = arith.constant 0.000000e+00 : f32
    %110 = vector.shape_cast %108 : vector<1x32xi1> to vector<1x32xi1>
    %111 = vector.broadcast %110 : vector<1x32xi1> to vector<64x32xi1>
    %112 = vector.broadcast %cst_33 : f32 to vector<64x32xf32>
    %113 = arith.select %111, %100, %112 : vector<64x32xi1>, vector<64x32xf32>
    %114 = vector.broadcast %109 : vector<64x1xf32> to vector<64x32xf32>
    %115 = arith.mulf %114, %113 : vector<64x32xf32>
    %116 = arith.addf %99, %115 : vector<64x32xf32>
    %117 = arith.mulf %116, %116 : vector<64x32xf32>
    %cst_34 = arith.constant 0.000000e+00 : f32
    %118 = vector.broadcast %cst_34 : f32 to vector<64x32xf32>
    %119 = vector.shape_cast %3 : vector<1x32xi1> to vector<1x32xi1>
    %120 = vector.broadcast %119 : vector<1x32xi1> to vector<64x32xi1>
    %121 = arith.select %120, %116, %118 : vector<64x32xi1>, vector<64x32xf32>
    %cst_35 = arith.constant dense<0.000000e+00> : vector<64xf32>
    %122 = vector.multi_reduction <add>, %121, %cst_35 [1] : vector<64x32xf32> to vector<64xf32>
    %123 = vector.shape_cast %122 : vector<64xf32> to vector<64x1xf32>
    %124 = vector.shape_cast %3 : vector<1x32xi1> to vector<1x32xi1>
    %125 = vector.broadcast %124 : vector<1x32xi1> to vector<64x32xi1>
    %126 = arith.select %125, %118, %116 : vector<64x32xi1>, vector<64x32xf32>
    %cst_36 = arith.constant dense<0.000000e+00> : vector<64xf32>
    %127 = vector.multi_reduction <add>, %126, %cst_36 [1] : vector<64x32xf32> to vector<64xf32>
    %128 = vector.shape_cast %127 : vector<64xf32> to vector<64x1xf32>
    %129 = vector.shape_cast %3 : vector<1x32xi1> to vector<1x32xi1>
    %130 = vector.broadcast %129 : vector<1x32xi1> to vector<64x32xi1>
    %131 = arith.select %130, %117, %118 : vector<64x32xi1>, vector<64x32xf32>
    %cst_37 = arith.constant dense<0.000000e+00> : vector<64xf32>
    %132 = vector.multi_reduction <add>, %131, %cst_37 [1] : vector<64x32xf32> to vector<64xf32>
    %133 = vector.shape_cast %132 : vector<64xf32> to vector<64x1xf32>
    %134 = vector.shape_cast %3 : vector<1x32xi1> to vector<1x32xi1>
    %135 = vector.broadcast %134 : vector<1x32xi1> to vector<64x32xi1>
    %136 = arith.select %135, %118, %117 : vector<64x32xi1>, vector<64x32xf32>
    %cst_38 = arith.constant dense<0.000000e+00> : vector<64xf32>
    %137 = vector.multi_reduction <add>, %136, %cst_38 [1] : vector<64x32xf32> to vector<64xf32>
    %138 = vector.shape_cast %137 : vector<64xf32> to vector<64x1xf32>
    %cst_39 = arith.constant 3.125000e-02 : f32
    %139 = vector.broadcast %cst_39 : f32 to vector<64x1xf32>
    %140 = arith.mulf %123, %139 : vector<64x1xf32>
    %cst_40 = arith.constant 3.125000e-02 : f32
    %141 = vector.broadcast %cst_40 : f32 to vector<64x1xf32>
    %142 = arith.mulf %128, %141 : vector<64x1xf32>
    %143 = vector.shape_cast %3 : vector<1x32xi1> to vector<1x32xi1>
    %144 = vector.broadcast %143 : vector<1x32xi1> to vector<64x32xi1>
    %145 = vector.shape_cast %140 : vector<64x1xf32> to vector<64x1xf32>
    %146 = vector.broadcast %145 : vector<64x1xf32> to vector<64x32xf32>
    %147 = vector.shape_cast %142 : vector<64x1xf32> to vector<64x1xf32>
    %148 = vector.broadcast %147 : vector<64x1xf32> to vector<64x32xf32>
    %149 = arith.select %144, %146, %148 : vector<64x32xi1>, vector<64x32xf32>
    %cst_41 = arith.constant 3.125000e-02 : f32
    %150 = vector.broadcast %cst_41 : f32 to vector<64x1xf32>
    %151 = arith.mulf %133, %150 : vector<64x1xf32>
    %cst_42 = arith.constant 3.125000e-02 : f32
    %152 = vector.broadcast %cst_42 : f32 to vector<64x1xf32>
    %153 = arith.mulf %138, %152 : vector<64x1xf32>
    %154 = vector.shape_cast %3 : vector<1x32xi1> to vector<1x32xi1>
    %155 = vector.broadcast %154 : vector<1x32xi1> to vector<64x32xi1>
    %156 = vector.shape_cast %151 : vector<64x1xf32> to vector<64x1xf32>
    %157 = vector.broadcast %156 : vector<64x1xf32> to vector<64x32xf32>
    %158 = vector.shape_cast %153 : vector<64x1xf32> to vector<64x1xf32>
    %159 = vector.broadcast %158 : vector<64x1xf32> to vector<64x32xf32>
    %160 = arith.select %155, %157, %159 : vector<64x32xi1>, vector<64x32xf32>
    %c0_43 = arith.constant 0 : index
    %c0_44 = arith.constant 0 : index
    %161 = vector.load %arg4[%c0_43, %c0_44] : memref<64x64xf32, #tpu.memory_space<vmem>>, vector<64x64xf32>
    %cst_45 = arith.constant dense<0.000000e+00> : vector<64x32xf32>
    %162 = tpu.matmul %161, %149, %cst_45 {dimension_numbers = #tpu.dot_dimension_numbers<[1], [0], [0], [1], [0, 0, 1, 1], [], []>} : vector<64x64xf32>, vector<64x32xf32>, vector<64x32xf32> -> vector<64x32xf32>
    %c0_46 = arith.constant 0 : index
    %c0_47 = arith.constant 0 : index
    %163 = vector.load %arg4[%c0_46, %c0_47] : memref<64x64xf32, #tpu.memory_space<vmem>>, vector<64x64xf32>
    %cst_48 = arith.constant dense<0.000000e+00> : vector<64x32xf32>
    %164 = tpu.matmul %163, %160, %cst_48 {dimension_numbers = #tpu.dot_dimension_numbers<[1], [0], [0], [1], [0, 0, 1, 1], [], []>} : vector<64x64xf32>, vector<64x32xf32>, vector<64x32xf32> -> vector<64x32xf32>
    %165 = arith.mulf %162, %162 : vector<64x32xf32>
    %166 = arith.subf %164, %165 : vector<64x32xf32>
    %cst_49 = arith.constant 0.000000e+00 : f32
    %167 = vector.broadcast %cst_49 : f32 to vector<64x32xf32>
    %168 = arith.maximumf %166, %167 : vector<64x32xf32>
    %169 = arith.subf %116, %162 : vector<64x32xf32>
    %cst_50 = arith.constant 9.99999974E-6 : f32
    %170 = vector.broadcast %cst_50 : f32 to vector<64x32xf32>
    %171 = arith.addf %168, %170 : vector<64x32xf32>
    %172 = math.rsqrt %171 : vector<64x32xf32>
    %173 = arith.mulf %169, %172 : vector<64x32xf32>
    %c0_51 = arith.constant 0 : index
    %c0_52 = arith.constant 0 : index
    %174 = vector.load %arg6[%c0_51, %c0_52] : memref<64x1xf32, #tpu.memory_space<vmem>>, vector<64x1xf32>
    %175 = vector.broadcast %174 : vector<64x1xf32> to vector<64x32xf32>
    %176 = arith.mulf %173, %175 : vector<64x32xf32>
    %c0_53 = arith.constant 0 : index
    %c0_54 = arith.constant 0 : index
    %177 = vector.load %arg7[%c0_53, %c0_54] : memref<64x1xf32, #tpu.memory_space<vmem>>, vector<64x1xf32>
    %178 = vector.broadcast %177 : vector<64x1xf32> to vector<64x32xf32>
    %179 = arith.addf %176, %178 : vector<64x32xf32>
    %180 = arith.negf %179 : vector<64x32xf32>
    %181 = math.exp %180 : vector<64x32xf32>
    %cst_55 = arith.constant 1.000000e+00 : f32
    %182 = vector.broadcast %cst_55 : f32 to vector<64x32xf32>
    %183 = arith.addf %182, %181 : vector<64x32xf32>
    %184 = arith.divf %182, %183 : vector<64x32xf32>
    %c0_56 = arith.constant 0 : index
    %c0_57 = arith.constant 0 : index
    %185 = vector.load %arg3[%c0_56, %c0_57] : memref<32x512xf32, #tpu.memory_space<vmem>>, vector<32x512xf32>
    %cst_58 = arith.constant dense<0.000000e+00> : vector<64x512xf32>
    %186 = tpu.matmul %184, %185, %cst_58 {dimension_numbers = #tpu.dot_dimension_numbers<[1], [0], [0], [1], [0, 0, 1, 1], [], []>} : vector<64x32xf32>, vector<32x512xf32>, vector<64x512xf32> -> vector<64x512xf32>
    %187 = vector.extract_strided_slice %186 {offsets = [0, 0], sizes = [64, 256], strides = [1, 1]} : vector<64x512xf32> to vector<64x256xf32>
    %188 = vector.extract_strided_slice %186 {offsets = [0, 256], sizes = [64, 256], strides = [1, 1]} : vector<64x512xf32> to vector<64x256xf32>
    %189 = arith.mulf %187, %188 : vector<64x256xf32>
    %190 = arith.mulf %0, %189 : vector<64x256xf32>
    %c0_59 = arith.constant 0 : index
    %c0_60 = arith.constant 0 : index
    %191 = vector.load %arg8[%c0_59, %c0_60] : memref<64x256xf32, #tpu.memory_space<vmem>>, vector<64x256xf32>
    tpu.vector_store %arg8[%c0_59, %c0_60], %190 {strides = array<i32>} : memref<64x256xf32, #tpu.memory_space<vmem>>, vector<64x256xf32>,
    return
  }
  func.func @transform_0(%arg0: i32) -> (i32, i32) {
    %c0_i32 = arith.constant 0 : i32
    %c0_i32_0 = arith.constant 0 : i32
    %c0_i32_1 = arith.constant 0 : i32
    return %c0_i32, %c0_i32_0 : i32, i32
  }
  func.func @transform_1(%arg0: i32) -> (i32, i32) {
    %c0_i32 = arith.constant 0 : i32
    %c0_i32_0 = arith.constant 0 : i32
    %c0_i32_1 = arith.constant 0 : i32
    return %c0_i32, %c0_i32_0 : i32, i32
  }
  func.func @transform_2(%arg0: i32) -> (i32, i32) {
    %c0_i32 = arith.constant 0 : i32
    %c0_i32_0 = arith.constant 0 : i32
    %c0_i32_1 = arith.constant 0 : i32
    return %c0_i32, %c0_i32_0 : i32, i32
  }
  func.func @transform_3(%arg0: i32) -> (i32, i32) {
    %c0_i32 = arith.constant 0 : i32
    %c0_i32_0 = arith.constant 0 : i32
    %c0_i32_1 = arith.constant 0 : i32
    return %c0_i32, %c0_i32_0 : i32, i32
  }
  func.func @transform_4(%arg0: i32) -> (i32, i32) {
    %c0_i32 = arith.constant 0 : i32
    %c0_i32_0 = arith.constant 0 : i32
    %c0_i32_1 = arith.constant 0 : i32
    return %c0_i32, %c0_i32_0 : i32, i32
  }
  func.func @transform_5(%arg0: i32) -> (i32, i32) {
    %c0_i32 = arith.constant 0 : i32
    %c0_i32_0 = arith.constant 0 : i32
    %c0_i32_1 = arith.constant 0 : i32
    return %c0_i32, %c0_i32_0 : i32, i32
  }
  func.func @transform_6(%arg0: i32) -> (i32, i32) {
    %c0_i32 = arith.constant 0 : i32
    %c0_i32_0 = arith.constant 0 : i32
    %c0_i32_1 = arith.constant 0 : i32
    return %c0_i32, %c0_i32_0 : i32, i32
  }
  func.func @transform_7(%arg0: i32) -> (i32, i32) {
    %c0_i32 = arith.constant 0 : i32
    %c0_i32_0 = arith.constant 0 : i32
    %c0_i32_1 = arith.constant 0 : i32
    return %c0_i32, %c0_i32_0 : i32, i32
  }
}

</mosaic_0001>

<llo_original>
// kernel: tpu_custom_call.1
$region0: #{tpu_custom_call.1}
  #allocation0 [shape = 'u32[]', space=smem, size = 0x4, offset = 0x4, fixed_abs, tag = 'smem constant byte address 0x4 - core index']
  #allocation1 [shape = 'u32[72,128]{1,0:T(1,128)}', space=vmem, size = 0x9000, scoped, tag = 'internal scratch']
  %s0 = inlined_call_operand.vmem [shape: f32[64,256], index: 0, kind: input, shape index: {}]
  %s1 = inlined_call_operand.vmem [shape: f32[256,32], index: 1, kind: input, shape index: {}]
  %s2 = inlined_call_operand.vmem [shape: f32[32,512], index: 2, kind: input, shape index: {}]
  %s3 = inlined_call_operand.vmem [shape: f32[64,64], index: 3, kind: input, shape index: {}]
  %s4 = inlined_call_operand.vmem [shape: f32[64,7], index: 4, kind: input, shape index: {}]
  %s5 = inlined_call_operand.vmem [shape: f32[64,1], index: 5, kind: input, shape index: {}]
  %s6 = inlined_call_operand.vmem [shape: f32[64,1], index: 6, kind: input, shape index: {}]
  %s7 = inlined_call_operand.hbm [shape: f32[64,256], index: 7, kind: output, shape index: {}]
  %s8 = sld [smem:[#allocation0]]
  $region38: #{tpu_custom_call.1} parent=0
    _
  %s10 = ssub.s32 1, %s8
  %s11 = scalar_select 0, %s10, %s8
  $region1: #{tpu_custom_call.1} parent=0
    #allocation2 [shape = 'u8[65536]{0}', space=vmem, size = 0x10000, scoped, tag = 'output window, operand 0, single buffered']
    #allocation3 [shape = 's32[1]{0}', space=sflag, size = 0x4, scoped, tag = 'scoped memory for tpu_custom_call.1']
    %12 = vsyncpa [#allocation3], 0
    // Predicated region
    $region2: #{tpu_custom_call.1} parent=1 // pred_check
      _
    $region3: #{tpu_custom_call.1} parent=1 // pred_check_branch
      %14 = sbr.rel (0) target = $region5
    $region4: #{tpu_custom_call.1} parent=1 // pred_region
      _
    $region5: #{tpu_custom_call.1} parent=1 // pred_fallthru
      _
    // Predicated region
    $region6: #{tpu_custom_call.1} parent=1 // pred_check
      _
    $region7: #{tpu_custom_call.1} parent=1 // pred_check_branch
      %16 = sbr.rel (0) target = $region9
    $region8: #{tpu_custom_call.1} parent=1 // pred_region
      _
    $region9: #{tpu_custom_call.1} parent=1 // pred_fallthru
      _
    // Predicated region
    $region10: #{tpu_custom_call.1} parent=1 // pred_check
      _
    $region11: #{tpu_custom_call.1} parent=1 // pred_check_branch
      %18 = sbr.rel (0) target = $region13
    $region12: #{tpu_custom_call.1} parent=1 // pred_region
      _
    $region13: #{tpu_custom_call.1} parent=1 // pred_fallthru
      _
    // Predicated region
    $region14: #{tpu_custom_call.1} parent=1 // pred_check
      _
    $region15: #{tpu_custom_call.1} parent=1 // pred_check_branch
      %20 = sbr.rel (0) target = $region17
    $region16: #{tpu_custom_call.1} parent=1 // pred_region
      _
    $region17: #{tpu_custom_call.1} parent=1 // pred_fallthru
      _
    // Predicated region
    $region18: #{tpu_custom_call.1} parent=1 // pred_check
      _
    $region19: #{tpu_custom_call.1} parent=1 // pred_check_branch
      %22 = sbr.rel (0) target = $region21
    $region20: #{tpu_custom_call.1} parent=1 // pred_region
      _
    $region21: #{tpu_custom_call.1} parent=1 // pred_fallthru
      _
    // Predicated region
    $region22: #{tpu_custom_call.1} parent=1 // pred_check
      _
    $region23: #{tpu_custom_call.1} parent=1 // pred_check_branch
      %24 = sbr.rel (0) target = $region25
    $region24: #{tpu_custom_call.1} parent=1 // pred_region
      _
    $region25: #{tpu_custom_call.1} parent=1 // pred_fallthru
      _
    // Predicated region
    $region26: #{tpu_custom_call.1} parent=1 // pred_check
      _
    $region27: #{tpu_custom_call.1} parent=1 // pred_check_branch
      %26 = sbr.rel (0) target = $region29
    $region28: #{tpu_custom_call.1} parent=1 // pred_region
      _
    $region29: #{tpu_custom_call.1} parent=1 // pred_fallthru
      _
    %v27 = vld [vmem:[%s0] sm:$0xff]
    %v28 = vld [vmem:[%s0 + $0x8] sm:$0xff]
    %v29 = vld [vmem:[%s0 + $0x10] sm:$0xff]
    %v30 = vld [vmem:[%s0 + $0x18] sm:$0xff]
    %v31 = vld [vmem:[%s0 + $0x20] sm:$0xff]
    %v32 = vld [vmem:[%s0 + $0x28] sm:$0xff]
    %v33 = vld [vmem:[%s0 + $0x30] sm:$0xff]
    %v34 = vld [vmem:[%s0 + $0x38] sm:$0xff]
    %v35 = vld [vmem:[%s0 + $0x40] sm:$0xff]
    %v36 = vld [vmem:[%s0 + $0x48] sm:$0xff]
    %v37 = vld [vmem:[%s0 + $0x50] sm:$0xff]
    %v38 = vld [vmem:[%s0 + $0x58] sm:$0xff]
    %v39 = vld [vmem:[%s0 + $0x60] sm:$0xff]
    %v40 = vld [vmem:[%s0 + $0x68] sm:$0xff]
    %v41 = vld [vmem:[%s0 + $0x70] sm:$0xff]
    %v42 = vld [vmem:[%s0 + $0x78] sm:$0xff]
    %v43 = vlaneseq
    %v44 = vand.u32 %v43, 127
    %vm45 = vcmp.lt.s32.totalorder %v44, 16
    %v46 = vsub.s32 %v44, 16
    %v47 = vsel %vm45, %v44, %v46
    %v48 = vld [vmem:[%s1] sm:$0xff]
    %v49 = vld [vmem:[%s1 + $0x8] sm:$0xff]
    %v50 = vld [vmem:[%s1 + $0x10] sm:$0xff]
    %v51 = vld [vmem:[%s1 + $0x18] sm:$0xff]
    %v52 = vld [vmem:[%s1 + $0x20] sm:$0xff]
    %v53 = vld [vmem:[%s1 + $0x28] sm:$0xff]
    %v54 = vld [vmem:[%s1 + $0x30] sm:$0xff]
    %v55 = vld [vmem:[%s1 + $0x38] sm:$0xff]
    %v56 = vld [vmem:[%s1 + $0x40] sm:$0xff]
    %v57 = vld [vmem:[%s1 + $0x48] sm:$0xff]
    %v58 = vld [vmem:[%s1 + $0x50] sm:$0xff]
    %v59 = vld [vmem:[%s1 + $0x58] sm:$0xff]
    %v60 = vld [vmem:[%s1 + $0x60] sm:$0xff]
    %v61 = vld [vmem:[%s1 + $0x68] sm:$0xff]
    %v62 = vld [vmem:[%s1 + $0x70] sm:$0xff]
    %v63 = vld [vmem:[%s1 + $0x78] sm:$0xff]
    %v64 = vld [vmem:[%s1 + $0x80] sm:$0xff]
    %v65 = vld [vmem:[%s1 + $0x88] sm:$0xff]
    %v66 = vld [vmem:[%s1 + $0x90] sm:$0xff]
    %v67 = vld [vmem:[%s1 + $0x98] sm:$0xff]
    %v68 = vld [vmem:[%s1 + $0xa0] sm:$0xff]
    %v69 = vld [vmem:[%s1 + $0xa8] sm:$0xff]
    %v70 = vld [vmem:[%s1 + $0xb0] sm:$0xff]
    %v71 = vld [vmem:[%s1 + $0xb8] sm:$0xff]
    %v72 = vld [vmem:[%s1 + $0xc0] sm:$0xff]
    %v73 = vld [vmem:[%s1 + $0xc8] sm:$0xff]
    %v74 = vld [vmem:[%s1 + $0xd0] sm:$0xff]
    %v75 = vld [vmem:[%s1 + $0xd8] sm:$0xff]
    %v76 = vld [vmem:[%s1 + $0xe0] sm:$0xff]
    %v77 = vld [vmem:[%s1 + $0xe8] sm:$0xff]
    %v78 = vld [vmem:[%s1 + $0xf0] sm:$0xff]
    %v79 = vld [vmem:[%s1 + $0xf8] sm:$0xff]
    %80 = vmatpush.msra.mxu0 %v63
    %81 = vmatpush.msra.mxu0 %v62
    %82 = vmatpush.msra.mxu0 %v61
    %83 = vmatpush.msra.mxu0 %v60
    %84 = vmatpush.msra.mxu0 %v59
    %85 = vmatpush.msra.mxu0 %v58
    %86 = vmatpush.msra.mxu0 %v57
    %87 = vmatpush.msra.mxu0 %v56
    %88 = vmatpush.msra.mxu0 %v55
    %89 = vmatpush.msra.mxu0 %v54
    %90 = vmatpush.msra.mxu0 %v53
    %91 = vmatpush.msra.mxu0 %v52
    %92 = vmatpush.msra.mxu0 %v51
    %93 = vmatpush.msra.mxu0 %v50
    %94 = vmatpush.msra.mxu0 %v49
    %95 = vmatpush.msra.mxu0 %v48
    %96 = vmatmul.f32.gmra.mxu0 %v27
    %v97 = vpop.f32.mrf.mxu0
    %v98 = vadd.f32 0.0, %v97
    %99 = vmatmul.f32.gmra.mxu0 %v29
    %v100 = vpop.f32.mrf.mxu0
    %v101 = vadd.f32 0.0, %v100
    %102 = vmatmul.f32.gmra.mxu0 %v31
    %v103 = vpop.f32.mrf.mxu0
    %v104 = vadd.f32 0.0, %v103
    %105 = vmatmul.f32.gmra.mxu0 %v33
    %v106 = vpop.f32.mrf.mxu0
    %v107 = vadd.f32 0.0, %v106
    %108 = vmatmul.f32.gmra.mxu0 %v35
    %v109 = vpop.f32.mrf.mxu0
    %v110 = vadd.f32 0.0, %v109
    %111 = vmatmul.f32.gmra.mxu0 %v37
    %v112 = vpop.f32.mrf.mxu0
    %v113 = vadd.f32 0.0, %v112
    %114 = vmatmul.f32.gmra.mxu0 %v39
    %v115 = vpop.f32.mrf.mxu0
    %v116 = vadd.f32 0.0, %v115
    %117 = vmatmul.f32.gmra.mxu0 %v41
    %v118 = vpop.f32.mrf.mxu0
    %v119 = vadd.f32 0.0, %v118
    %120 = vdwg.mxu0
    %121 = vmatpush.msra.mxu0 %v79
    %122 = vmatpush.msra.mxu0 %v78
    %123 = vmatpush.msra.mxu0 %v77
    %124 = vmatpush.msra.mxu0 %v76
    %125 = vmatpush.msra.mxu0 %v75
    %126 = vmatpush.msra.mxu0 %v74
    %127 = vmatpush.msra.mxu0 %v73
    %128 = vmatpush.msra.mxu0 %v72
    %129 = vmatpush.msra.mxu0 %v71
    %130 = vmatpush.msra.mxu0 %v70
    %131 = vmatpush.msra.mxu0 %v69
    %132 = vmatpush.msra.mxu0 %v68
    %133 = vmatpush.msra.mxu0 %v67
    %134 = vmatpush.msra.mxu0 %v66
    %135 = vmatpush.msra.mxu0 %v65
    %136 = vmatpush.msra.mxu0 %v64
    %137 = vmatmul.f32.gmra.mxu0 %v28
    %v138 = vpop.f32.mrf.mxu0
    %v139 = vadd.f32 %v98, %v138
    %140 = vmatmul.f32.gmra.mxu0 %v30
    %v141 = vpop.f32.mrf.mxu0
    %v142 = vadd.f32 %v101, %v141
    %143 = vmatmul.f32.gmra.mxu0 %v32
    %v144 = vpop.f32.mrf.mxu0
    %v145 = vadd.f32 %v104, %v144
    %146 = vmatmul.f32.gmra.mxu0 %v34
    %v147 = vpop.f32.mrf.mxu0
    %v148 = vadd.f32 %v107, %v147
    %149 = vmatmul.f32.gmra.mxu0 %v36
    %v150 = vpop.f32.mrf.mxu0
    %v151 = vadd.f32 %v110, %v150
    %152 = vmatmul.f32.gmra.mxu0 %v38
    %v153 = vpop.f32.mrf.mxu0
    %v154 = vadd.f32 %v113, %v153
    %155 = vmatmul.f32.gmra.mxu0 %v40
    %v156 = vpop.f32.mrf.mxu0
    %v157 = vadd.f32 %v116, %v156
    %158 = vmatmul.f32.gmra.mxu0 %v42
    %v159 = vpop.f32.mrf.mxu0
    %v160 = vadd.f32 %v119, %v159
    %161 = vdwg.mxu0
    %v162 = vld [vmem:[%s4] sm:$0xff]
    %v163 = vld [vmem:[%s4 + $0x8] sm:$0xff]
    %v164 = vld [vmem:[%s4 + $0x10] sm:$0xff]
    %v165 = vld [vmem:[%s4 + $0x18] sm:$0xff]
    %v166 = vld [vmem:[%s4 + $0x20] sm:$0xff]
    %v167 = vld [vmem:[%s4 + $0x28] sm:$0xff]
    %v168 = vld [vmem:[%s4 + $0x30] sm:$0xff]
    %v169 = vld [vmem:[%s4 + $0x38] sm:$0xff]
    %171 = vset.pattern.permute.xlu0 3
    %172 = vperm.xlu0 %171, %v162
    %v173 = vpop.permute.xlu0 %172
    %176 = vset.pattern.permute.xlu0 3
    %177 = vperm.xlu0 %176, %v163
    %v178 = vpop.permute.xlu0 %177
    %181 = vset.pattern.permute.xlu0 3
    %182 = vperm.xlu0 %181, %v164
    %v183 = vpop.permute.xlu0 %182
    %186 = vset.pattern.permute.xlu0 3
    %187 = vperm.xlu0 %186, %v165
    %v188 = vpop.permute.xlu0 %187
    %191 = vset.pattern.permute.xlu0 3
    %192 = vperm.xlu0 %191, %v166
    %v193 = vpop.permute.xlu0 %192
    %196 = vset.pattern.permute.xlu0 3
    %197 = vperm.xlu0 %196, %v167
    %v198 = vpop.permute.xlu0 %197
    %201 = vset.pattern.permute.xlu0 3
    %202 = vperm.xlu0 %201, %v168
    %v203 = vpop.permute.xlu0 %202
    %206 = vset.pattern.permute.xlu0 3
    %207 = vperm.xlu0 %206, %v169
    %v208 = vpop.permute.xlu0 %207
    %v210 = vmul.f32 %v173, %v139
    %v211 = vmul.f32 %v178, %v142
    %v212 = vmul.f32 %v183, %v145
    %v213 = vmul.f32 %v188, %v148
    %v214 = vmul.f32 %v193, %v151
    %v215 = vmul.f32 %v198, %v154
    %v216 = vmul.f32 %v203, %v157
    %v217 = vmul.f32 %v208, %v160
    %vm218 = vcmask 1047808
    %219 = vrot.lane.b32.xlu0 %v139, 32
    %v220 = vpop.permute.xlu0 %219
    %v221 = vsel %vm218, %v220, %v139
    %222 = vrot.lane.b32.xlu0 %v142, 32
    %v223 = vpop.permute.xlu0 %222
    %v224 = vsel %vm218, %v223, %v142
    %225 = vrot.lane.b32.xlu0 %v145, 32
    %v226 = vpop.permute.xlu0 %225
    %v227 = vsel %vm218, %v226, %v145
    %228 = vrot.lane.b32.xlu0 %v148, 32
    %v229 = vpop.permute.xlu0 %228
    %v230 = vsel %vm218, %v229, %v148
    %231 = vrot.lane.b32.xlu0 %v151, 32
    %v232 = vpop.permute.xlu0 %231
    %v233 = vsel %vm218, %v232, %v151
    %234 = vrot.lane.b32.xlu0 %v154, 32
    %v235 = vpop.permute.xlu0 %234
    %v236 = vsel %vm218, %v235, %v154
    %237 = vrot.lane.b32.xlu0 %v157, 32
    %v238 = vpop.permute.xlu0 %237
    %v239 = vsel %vm218, %v238, %v157
    %240 = vrot.lane.b32.xlu0 %v160, 32
    %v241 = vpop.permute.xlu0 %240
    %v242 = vsel %vm218, %v241, %v160
    %243 = vrot.lane.b32.xlu0 %v221, 32
    %v244 = vpop.permute.xlu0 %243
    %245 = vrot.lane.b32.xlu0 %v224, 32
    %v246 = vpop.permute.xlu0 %245
    %247 = vrot.lane.b32.xlu0 %v227, 32
    %v248 = vpop.permute.xlu0 %247
    %249 = vrot.lane.b32.xlu0 %v230, 32
    %v250 = vpop.permute.xlu0 %249
    %251 = vrot.lane.b32.xlu0 %v233, 32
    %v252 = vpop.permute.xlu0 %251
    %253 = vrot.lane.b32.xlu0 %v236, 32
    %v254 = vpop.permute.xlu0 %253
    %255 = vrot.lane.b32.xlu0 %v239, 32
    %v256 = vpop.permute.xlu0 %255
    %257 = vrot.lane.b32.xlu0 %v242, 32
    %v258 = vpop.permute.xlu0 %257
    %v259 = vsel %vm218, %v244, %v139
    %v260 = vsel %vm218, %v246, %v142
    %v261 = vsel %vm218, %v248, %v145
    %v262 = vsel %vm218, %v250, %v148
    %v263 = vsel %vm218, %v252, %v151
    %v264 = vsel %vm218, %v254, %v154
    %v265 = vsel %vm218, %v256, %v157
    %v266 = vsel %vm218, %v258, %v160
    %v267 = vadd.s32 %v47, 4294967293
    %vm268 = vcmp.ge.s32.totalorder %v267, 0
    %vm269 = vcmp.lt.s32.totalorder %v267, 16
    %vm270 = vmand %vm268, %vm269
    %v271 = vsel %vm270, 1, 0
    %vm272 = vcmp.eq.s32.totalorder %v271, 1
    %281 = vrot.lane.b32.xlu0 %v259, 99
    %v282 = vpop.permute.xlu0 %281
    %283 = vrot.lane.b32.xlu0 %v260, 99
    %v284 = vpop.permute.xlu0 %283
    %285 = vrot.lane.b32.xlu0 %v261, 99
    %v286 = vpop.permute.xlu0 %285
    %287 = vrot.lane.b32.xlu0 %v262, 99
    %v288 = vpop.permute.xlu0 %287
    %289 = vrot.lane.b32.xlu0 %v263, 99
    %v290 = vpop.permute.xlu0 %289
    %291 = vrot.lane.b32.xlu0 %v264, 99
    %v292 = vpop.permute.xlu0 %291
    %293 = vrot.lane.b32.xlu0 %v265, 99
    %v294 = vpop.permute.xlu0 %293
    %295 = vrot.lane.b32.xlu0 %v266, 99
    %v296 = vpop.permute.xlu0 %295
    %v305 = vsel %vm272, %v282, 0.0
    %v306 = vsel %vm272, %v284, 0.0
    %v307 = vsel %vm272, %v286, 0.0
    %v308 = vsel %vm272, %v288, 0.0
    %v309 = vsel %vm272, %v290, 0.0
    %v310 = vsel %vm272, %v292, 0.0
    %v311 = vsel %vm272, %v294, 0.0
    %v312 = vsel %vm272, %v296, 0.0
    %313 = vset.pattern.permute.xlu0 0
    %314 = vperm.xlu0 %313, %v162
    %v315 = vpop.permute.xlu0 %314
    %317 = vset.pattern.permute.xlu0 0
    %318 = vperm.xlu0 %317, %v163
    %v319 = vpop.permute.xlu0 %318
    %321 = vset.pattern.permute.xlu0 0
    %322 = vperm.xlu0 %321, %v164
    %v323 = vpop.permute.xlu0 %322
    %325 = vset.pattern.permute.xlu0 0
    %326 = vperm.xlu0 %325, %v165
    %v327 = vpop.permute.xlu0 %326
    %329 = vset.pattern.permute.xlu0 0
    %330 = vperm.xlu0 %329, %v166
    %v331 = vpop.permute.xlu0 %330
    %333 = vset.pattern.permute.xlu0 0
    %334 = vperm.xlu0 %333, %v167
    %v335 = vpop.permute.xlu0 %334
    %337 = vset.pattern.permute.xlu0 0
    %338 = vperm.xlu0 %337, %v168
    %v339 = vpop.permute.xlu0 %338
    %341 = vset.pattern.permute.xlu0 0
    %342 = vperm.xlu0 %341, %v169
    %v343 = vpop.permute.xlu0 %342
    %v345 = vmul.f32 %v315, %v305
    %v346 = vmul.f32 %v319, %v306
    %v347 = vmul.f32 %v323, %v307
    %v348 = vmul.f32 %v327, %v308
    %v349 = vmul.f32 %v331, %v309
    %v350 = vmul.f32 %v335, %v310
    %v351 = vmul.f32 %v339, %v311
    %v352 = vmul.f32 %v343, %v312
    %v353 = vadd.f32 %v210, %v345
    %v354 = vadd.f32 %v211, %v346
    %v355 = vadd.f32 %v212, %v347
    %v356 = vadd.f32 %v213, %v348
    %v357 = vadd.f32 %v214, %v349
    %v358 = vadd.f32 %v215, %v350
    %v359 = vadd.f32 %v216, %v351
    %v360 = vadd.f32 %v217, %v352
    %v361 = vadd.s32 %v47, 4294967294
    %vm362 = vcmp.ge.s32.totalorder %v361, 0
    %vm363 = vcmp.lt.s32.totalorder %v361, 16
    %vm364 = vmand %vm362, %vm363
    %v365 = vsel %vm364, 1, 0
    %vm366 = vcmp.eq.s32.totalorder %v365, 1
    %367 = vrot.lane.b32.xlu0 %v259, 98
    %v368 = vpop.permute.xlu0 %367
    %369 = vrot.lane.b32.xlu0 %v260, 98
    %v370 = vpop.permute.xlu0 %369
    %371 = vrot.lane.b32.xlu0 %v261, 98
    %v372 = vpop.permute.xlu0 %371
    %373 = vrot.lane.b32.xlu0 %v262, 98
    %v374 = vpop.permute.xlu0 %373
    %375 = vrot.lane.b32.xlu0 %v263, 98
    %v376 = vpop.permute.xlu0 %375
    %377 = vrot.lane.b32.xlu0 %v264, 98
    %v378 = vpop.permute.xlu0 %377
    %379 = vrot.lane.b32.xlu0 %v265, 98
    %v380 = vpop.permute.xlu0 %379
    %381 = vrot.lane.b32.xlu0 %v266, 98
    %v382 = vpop.permute.xlu0 %381
    %v391 = vsel %vm366, %v368, 0.0
    %v392 = vsel %vm366, %v370, 0.0
    %v393 = vsel %vm366, %v372, 0.0
    %v394 = vsel %vm366, %v374, 0.0
    %v395 = vsel %vm366, %v376, 0.0
    %v396 = vsel %vm366, %v378, 0.0
    %v397 = vsel %vm366, %v380, 0.0
    %v398 = vsel %vm366, %v382, 0.0
    %399 = vset.pattern.permute.xlu0 1
    %400 = vperm.xlu0 %399, %v162
    %v401 = vpop.permute.xlu0 %400
    %403 = vset.pattern.permute.xlu0 1
    %404 = vperm.xlu0 %403, %v163
    %v405 = vpop.permute.xlu0 %404
    %407 = vset.pattern.permute.xlu0 1
    %408 = vperm.xlu0 %407, %v164
    %v409 = vpop.permute.xlu0 %408
    %411 = vset.pattern.permute.xlu0 1
    %412 = vperm.xlu0 %411, %v165
    %v413 = vpop.permute.xlu0 %412
    %415 = vset.pattern.permute.xlu0 1
    %416 = vperm.xlu0 %415, %v166
    %v417 = vpop.permute.xlu0 %416
    %419 = vset.pattern.permute.xlu0 1
    %420 = vperm.xlu0 %419, %v167
    %v421 = vpop.permute.xlu0 %420
    %423 = vset.pattern.permute.xlu0 1
    %424 = vperm.xlu0 %423, %v168
    %v425 = vpop.permute.xlu0 %424
    %427 = vset.pattern.permute.xlu0 1
    %428 = vperm.xlu0 %427, %v169
    %v429 = vpop.permute.xlu0 %428
    %v431 = vmul.f32 %v401, %v391
    %v432 = vmul.f32 %v405, %v392
    %v433 = vmul.f32 %v409, %v393
    %v434 = vmul.f32 %v413, %v394
    %v435 = vmul.f32 %v417, %v395
    %v436 = vmul.f32 %v421, %v396
    %v437 = vmul.f32 %v425, %v397
    %v438 = vmul.f32 %v429, %v398
    %v439 = vadd.f32 %v353, %v431
    %v440 = vadd.f32 %v354, %v432
    %v441 = vadd.f32 %v355, %v433
    %v442 = vadd.f32 %v356, %v434
    %v443 = vadd.f32 %v357, %v435
    %v444 = vadd.f32 %v358, %v436
    %v445 = vadd.f32 %v359, %v437
    %v446 = vadd.f32 %v360, %v438
    %v447 = vadd.s32 %v47, 4294967295
    %vm448 = vcmp.ge.s32.totalorder %v447, 0
    %vm449 = vcmp.lt.s32.totalorder %v447, 16
    %vm450 = vmand %vm448, %vm449
    %v451 = vsel %vm450, 1, 0
    %vm452 = vcmp.eq.s32.totalorder %v451, 1
    %453 = vrot.lane.b32.xlu0 %v259, 97
    %v454 = vpop.permute.xlu0 %453
    %455 = vrot.lane.b32.xlu0 %v260, 97
    %v456 = vpop.permute.xlu0 %455
    %457 = vrot.lane.b32.xlu0 %v261, 97
    %v458 = vpop.permute.xlu0 %457
    %459 = vrot.lane.b32.xlu0 %v262, 97
    %v460 = vpop.permute.xlu0 %459
    %461 = vrot.lane.b32.xlu0 %v263, 97
    %v462 = vpop.permute.xlu0 %461
    %463 = vrot.lane.b32.xlu0 %v264, 97
    %v464 = vpop.permute.xlu0 %463
    %465 = vrot.lane.b32.xlu0 %v265, 97
    %v466 = vpop.permute.xlu0 %465
    %467 = vrot.lane.b32.xlu0 %v266, 97
    %v468 = vpop.permute.xlu0 %467
    %v477 = vsel %vm452, %v454, 0.0
    %v478 = vsel %vm452, %v456, 0.0
    %v479 = vsel %vm452, %v458, 0.0
    %v480 = vsel %vm452, %v460, 0.0
    %v481 = vsel %vm452, %v462, 0.0
    %v482 = vsel %vm452, %v464, 0.0
    %v483 = vsel %vm452, %v466, 0.0
    %v484 = vsel %vm452, %v468, 0.0
    %485 = vset.pattern.permute.xlu0 2
    %486 = vperm.xlu0 %485, %v162
    %v487 = vpop.permute.xlu0 %486
    %489 = vset.pattern.permute.xlu0 2
    %490 = vperm.xlu0 %489, %v163
    %v491 = vpop.permute.xlu0 %490
    %493 = vset.pattern.permute.xlu0 2
    %494 = vperm.xlu0 %493, %v164
    %v495 = vpop.permute.xlu0 %494
    %497 = vset.pattern.permute.xlu0 2
    %498 = vperm.xlu0 %497, %v165
    %v499 = vpop.permute.xlu0 %498
    %501 = vset.pattern.permute.xlu0 2
    %502 = vperm.xlu0 %501, %v166
    %v503 = vpop.permute.xlu0 %502
    %505 = vset.pattern.permute.xlu0 2
    %506 = vperm.xlu0 %505, %v167
    %v507 = vpop.permute.xlu0 %506
    %509 = vset.pattern.permute.xlu0 2
    %510 = vperm.xlu0 %509, %v168
    %v511 = vpop.permute.xlu0 %510
    %513 = vset.pattern.permute.xlu0 2
    %514 = vperm.xlu0 %513, %v169
    %v515 = vpop.permute.xlu0 %514
    %v517 = vmul.f32 %v487, %v477
    %v518 = vmul.f32 %v491, %v478
    %v519 = vmul.f32 %v495, %v479
    %v520 = vmul.f32 %v499, %v480
    %v521 = vmul.f32 %v503, %v481
    %v522 = vmul.f32 %v507, %v482
    %v523 = vmul.f32 %v511, %v483
    %v524 = vmul.f32 %v515, %v484
    %v525 = vadd.f32 %v439, %v517
    %v526 = vadd.f32 %v440, %v518
    %v527 = vadd.f32 %v441, %v519
    %v528 = vadd.f32 %v442, %v520
    %v529 = vadd.f32 %v443, %v521
    %v530 = vadd.f32 %v444, %v522
    %v531 = vadd.f32 %v445, %v523
    %v532 = vadd.f32 %v446, %v524
    %v533 = vadd.s32 %v47, 1
    %vm534 = vcmp.ge.s32.totalorder %v533, 0
    %vm535 = vcmp.lt.s32.totalorder %v533, 16
    %vm536 = vmand %vm534, %vm535
    %v537 = vsel %vm536, 1, 0
    %vm538 = vcmp.eq.s32.totalorder %v537, 1
    %539 = vrot.lane.b32.xlu0 %v259, 127
    %v540 = vpop.permute.xlu0 %539
    %541 = vrot.lane.b32.xlu0 %v260, 127
    %v542 = vpop.permute.xlu0 %541
    %543 = vrot.lane.b32.xlu0 %v261, 127
    %v544 = vpop.permute.xlu0 %543
    %545 = vrot.lane.b32.xlu0 %v262, 127
    %v546 = vpop.permute.xlu0 %545
    %547 = vrot.lane.b32.xlu0 %v263, 127
    %v548 = vpop.permute.xlu0 %547
    %549 = vrot.lane.b32.xlu0 %v264, 127
    %v550 = vpop.permute.xlu0 %549
    %551 = vrot.lane.b32.xlu0 %v265, 127
    %v552 = vpop.permute.xlu0 %551
    %553 = vrot.lane.b32.xlu0 %v266, 127
    %v554 = vpop.permute.xlu0 %553
    %v563 = vsel %vm538, %v540, 0.0
    %v564 = vsel %vm538, %v542, 0.0
    %v565 = vsel %vm538, %v544, 0.0
    %v566 = vsel %vm538, %v546, 0.0
    %v567 = vsel %vm538, %v548, 0.0
    %v568 = vsel %vm538, %v550, 0.0
    %v569 = vsel %vm538, %v552, 0.0
    %v570 = vsel %vm538, %v554, 0.0
    %571 = vset.pattern.permute.xlu0 4
    %572 = vperm.xlu0 %571, %v162
    %v573 = vpop.permute.xlu0 %572
    %575 = vset.pattern.permute.xlu0 4
    %576 = vperm.xlu0 %575, %v163
    %v577 = vpop.permute.xlu0 %576
    %579 = vset.pattern.permute.xlu0 4
    %580 = vperm.xlu0 %579, %v164
    %v581 = vpop.permute.xlu0 %580
    %583 = vset.pattern.permute.xlu0 4
    %584 = vperm.xlu0 %583, %v165
    %v585 = vpop.permute.xlu0 %584
    %587 = vset.pattern.permute.xlu0 4
    %588 = vperm.xlu0 %587, %v166
    %v589 = vpop.permute.xlu0 %588
    %591 = vset.pattern.permute.xlu0 4
    %592 = vperm.xlu0 %591, %v167
    %v593 = vpop.permute.xlu0 %592
    %595 = vset.pattern.permute.xlu0 4
    %596 = vperm.xlu0 %595, %v168
    %v597 = vpop.permute.xlu0 %596
    %599 = vset.pattern.permute.xlu0 4
    %600 = vperm.xlu0 %599, %v169
    %v601 = vpop.permute.xlu0 %600
    %v603 = vmul.f32 %v573, %v563
    %v604 = vmul.f32 %v577, %v564
    %v605 = vmul.f32 %v581, %v565
    %v606 = vmul.f32 %v585, %v566
    %v607 = vmul.f32 %v589, %v567
    %v608 = vmul.f32 %v593, %v568
    %v609 = vmul.f32 %v597, %v569
    %v610 = vmul.f32 %v601, %v570
    %v611 = vadd.f32 %v525, %v603
    %v612 = vadd.f32 %v526, %v604
    %v613 = vadd.f32 %v527, %v605
    %v614 = vadd.f32 %v528, %v606
    %v615 = vadd.f32 %v529, %v607
    %v616 = vadd.f32 %v530, %v608
    %v617 = vadd.f32 %v531, %v609
    %v618 = vadd.f32 %v532, %v610
    %v619 = vadd.s32 %v47, 2
    %vm620 = vcmp.ge.s32.totalorder %v619, 0
    %vm621 = vcmp.lt.s32.totalorder %v619, 16
    %vm622 = vmand %vm620, %vm621
    %v623 = vsel %vm622, 1, 0
    %vm624 = vcmp.eq.s32.totalorder %v623, 1
    %625 = vrot.lane.b32.xlu0 %v259, 126
    %v626 = vpop.permute.xlu0 %625
    %627 = vrot.lane.b32.xlu0 %v260, 126
    %v628 = vpop.permute.xlu0 %627
    %629 = vrot.lane.b32.xlu0 %v261, 126
    %v630 = vpop.permute.xlu0 %629
    %631 = vrot.lane.b32.xlu0 %v262, 126
    %v632 = vpop.permute.xlu0 %631
    %633 = vrot.lane.b32.xlu0 %v263, 126
    %v634 = vpop.permute.xlu0 %633
    %635 = vrot.lane.b32.xlu0 %v264, 126
    %v636 = vpop.permute.xlu0 %635
    %637 = vrot.lane.b32.xlu0 %v265, 126
    %v638 = vpop.permute.xlu0 %637
    %639 = vrot.lane.b32.xlu0 %v266, 126
    %v640 = vpop.permute.xlu0 %639
    %v649 = vsel %vm624, %v626, 0.0
    %v650 = vsel %vm624, %v628, 0.0
    %v651 = vsel %vm624, %v630, 0.0
    %v652 = vsel %vm624, %v632, 0.0
    %v653 = vsel %vm624, %v634, 0.0
    %v654 = vsel %vm624, %v636, 0.0
    %v655 = vsel %vm624, %v638, 0.0
    %v656 = vsel %vm624, %v640, 0.0
    %657 = vset.pattern.permute.xlu0 5
    %658 = vperm.xlu0 %657, %v162
    %v659 = vpop.permute.xlu0 %658
    %661 = vset.pattern.permute.xlu0 5
    %662 = vperm.xlu0 %661, %v163
    %v663 = vpop.permute.xlu0 %662
    %665 = vset.pattern.permute.xlu0 5
    %666 = vperm.xlu0 %665, %v164
    %v667 = vpop.permute.xlu0 %666
    %669 = vset.pattern.permute.xlu0 5
    %670 = vperm.xlu0 %669, %v165
    %v671 = vpop.permute.xlu0 %670
    %673 = vset.pattern.permute.xlu0 5
    %674 = vperm.xlu0 %673, %v166
    %v675 = vpop.permute.xlu0 %674
    %677 = vset.pattern.permute.xlu0 5
    %678 = vperm.xlu0 %677, %v167
    %v679 = vpop.permute.xlu0 %678
    %681 = vset.pattern.permute.xlu0 5
    %682 = vperm.xlu0 %681, %v168
    %v683 = vpop.permute.xlu0 %682
    %685 = vset.pattern.permute.xlu0 5
    %686 = vperm.xlu0 %685, %v169
    %v687 = vpop.permute.xlu0 %686
    %v689 = vmul.f32 %v659, %v649
    %v690 = vmul.f32 %v663, %v650
    %v691 = vmul.f32 %v667, %v651
    %v692 = vmul.f32 %v671, %v652
    %v693 = vmul.f32 %v675, %v653
    %v694 = vmul.f32 %v679, %v654
    %v695 = vmul.f32 %v683, %v655
    %v696 = vmul.f32 %v687, %v656
    %v697 = vadd.f32 %v611, %v689
    %v698 = vadd.f32 %v612, %v690
    %v699 = vadd.f32 %v613, %v691
    %v700 = vadd.f32 %v614, %v692
    %v701 = vadd.f32 %v615, %v693
    %v702 = vadd.f32 %v616, %v694
    %v703 = vadd.f32 %v617, %v695
    %v704 = vadd.f32 %v618, %v696
    %v705 = vadd.s32 %v47, 3
    %vm706 = vcmp.ge.s32.totalorder %v705, 0
    %vm707 = vcmp.lt.s32.totalorder %v705, 16
    %vm708 = vmand %vm706, %vm707
    %v709 = vsel %vm708, 1, 0
    %vm710 = vcmp.eq.s32.totalorder %v709, 1
    %711 = vrot.lane.b32.xlu0 %v259, 125
    %v712 = vpop.permute.xlu0 %711
    %713 = vrot.lane.b32.xlu0 %v260, 125
    %v714 = vpop.permute.xlu0 %713
    %715 = vrot.lane.b32.xlu0 %v261, 125
    %v716 = vpop.permute.xlu0 %715
    %717 = vrot.lane.b32.xlu0 %v262, 125
    %v718 = vpop.permute.xlu0 %717
    %719 = vrot.lane.b32.xlu0 %v263, 125
    %v720 = vpop.permute.xlu0 %719
    %721 = vrot.lane.b32.xlu0 %v264, 125
    %v722 = vpop.permute.xlu0 %721
    %723 = vrot.lane.b32.xlu0 %v265, 125
    %v724 = vpop.permute.xlu0 %723
    %725 = vrot.lane.b32.xlu0 %v266, 125
    %v726 = vpop.permute.xlu0 %725
    %v735 = vsel %vm710, %v712, 0.0
    %v736 = vsel %vm710, %v714, 0.0
    %v737 = vsel %vm710, %v716, 0.0
    %v738 = vsel %vm710, %v718, 0.0
    %v739 = vsel %vm710, %v720, 0.0
    %v740 = vsel %vm710, %v722, 0.0
    %v741 = vsel %vm710, %v724, 0.0
    %v742 = vsel %vm710, %v726, 0.0
    %743 = vset.pattern.permute.xlu0 6
    %744 = vperm.xlu0 %743, %v162
    %v745 = vpop.permute.xlu0 %744
    %747 = vset.pattern.permute.xlu0 6
    %748 = vperm.xlu0 %747, %v163
    %v749 = vpop.permute.xlu0 %748
    %751 = vset.pattern.permute.xlu0 6
    %752 = vperm.xlu0 %751, %v164
    %v753 = vpop.permute.xlu0 %752
    %755 = vset.pattern.permute.xlu0 6
    %756 = vperm.xlu0 %755, %v165
    %v757 = vpop.permute.xlu0 %756
    %759 = vset.pattern.permute.xlu0 6
    %760 = vperm.xlu0 %759, %v166
    %v761 = vpop.permute.xlu0 %760
    %763 = vset.pattern.permute.xlu0 6
    %764 = vperm.xlu0 %763, %v167
    %v765 = vpop.permute.xlu0 %764
    %767 = vset.pattern.permute.xlu0 6
    %768 = vperm.xlu0 %767, %v168
    %v769 = vpop.permute.xlu0 %768
    %771 = vset.pattern.permute.xlu0 6
    %772 = vperm.xlu0 %771, %v169
    %v773 = vpop.permute.xlu0 %772
    %v775 = vmul.f32 %v745, %v735
    %v776 = vmul.f32 %v749, %v736
    %v777 = vmul.f32 %v753, %v737
    %v778 = vmul.f32 %v757, %v738
    %v779 = vmul.f32 %v761, %v739
    %v780 = vmul.f32 %v765, %v740
    %v781 = vmul.f32 %v769, %v741
    %v782 = vmul.f32 %v773, %v742
    %v783 = vadd.f32 %v697, %v775
    %v784 = vadd.f32 %v698, %v776
    %v785 = vadd.f32 %v699, %v777
    %v786 = vadd.f32 %v700, %v778
    %v787 = vadd.f32 %v701, %v779
    %v788 = vadd.f32 %v702, %v780
    %v789 = vadd.f32 %v703, %v781
    %v790 = vadd.f32 %v704, %v782
    %v791 = vmul.f32 %v783, %v783
    %v792 = vmul.f32 %v784, %v784
    %v793 = vmul.f32 %v785, %v785
    %v794 = vmul.f32 %v786, %v786
    %v795 = vmul.f32 %v787, %v787
    %v796 = vmul.f32 %v788, %v788
    %v797 = vmul.f32 %v789, %v789
    %v798 = vmul.f32 %v790, %v790
    %v799 = vsel %vm45, 1, 0
    %vm800 = vcmp.eq.s32.totalorder %v799, 1
    %v801 = vsel %vm800, %v783, 0.0
    %v802 = vsel %vm800, %v784, 0.0
    %v803 = vsel %vm800, %v785, 0.0
    %v804 = vsel %vm800, %v786, 0.0
    %v805 = vsel %vm800, %v787, 0.0
    %v806 = vsel %vm800, %v788, 0.0
    %v807 = vsel %vm800, %v789, 0.0
    %v808 = vsel %vm800, %v790, 0.0
    %vm809 = vcmask 261120
    %v810 = vsel %vm809, %v801, 0.0
    %811 = vadd.xlane.f32.xlu0 %v810
    %v812 = vpop.xlane.xlu0 %811
    %v813 = vsel %vm809, %v802, 0.0
    %814 = vadd.xlane.f32.xlu0 %v813
    %v815 = vpop.xlane.xlu0 %814
    %v816 = vsel %vm809, %v803, 0.0
    %817 = vadd.xlane.f32.xlu0 %v816
    %v818 = vpop.xlane.xlu0 %817
    %v819 = vsel %vm809, %v804, 0.0
    %820 = vadd.xlane.f32.xlu0 %v819
    %v821 = vpop.xlane.xlu0 %820
    %v822 = vsel %vm809, %v805, 0.0
    %823 = vadd.xlane.f32.xlu0 %v822
    %v824 = vpop.xlane.xlu0 %823
    %v825 = vsel %vm809, %v806, 0.0
    %826 = vadd.xlane.f32.xlu0 %v825
    %v827 = vpop.xlane.xlu0 %826
    %v828 = vsel %vm809, %v807, 0.0
    %829 = vadd.xlane.f32.xlu0 %v828
    %v830 = vpop.xlane.xlu0 %829
    %v831 = vsel %vm809, %v808, 0.0
    %832 = vadd.xlane.f32.xlu0 %v831
    %v833 = vpop.xlane.xlu0 %832
    %v834 = vsel %vm800, 0.0, %v783
    %v835 = vsel %vm800, 0.0, %v784
    %v836 = vsel %vm800, 0.0, %v785
    %v837 = vsel %vm800, 0.0, %v786
    %v838 = vsel %vm800, 0.0, %v787
    %v839 = vsel %vm800, 0.0, %v788
    %v840 = vsel %vm800, 0.0, %v789
    %v841 = vsel %vm800, 0.0, %v790
    %v842 = vsel %vm809, %v834, 0.0
    %843 = vadd.xlane.f32.xlu0 %v842
    %v844 = vpop.xlane.xlu0 %843
    %v845 = vsel %vm809, %v835, 0.0
    %846 = vadd.xlane.f32.xlu0 %v845
    %v847 = vpop.xlane.xlu0 %846
    %v848 = vsel %vm809, %v836, 0.0
    %849 = vadd.xlane.f32.xlu0 %v848
    %v850 = vpop.xlane.xlu0 %849
    %v851 = vsel %vm809, %v837, 0.0
    %852 = vadd.xlane.f32.xlu0 %v851
    %v853 = vpop.xlane.xlu0 %852
    %v854 = vsel %vm809, %v838, 0.0
    %855 = vadd.xlane.f32.xlu0 %v854
    %v856 = vpop.xlane.xlu0 %855
    %v857 = vsel %vm809, %v839, 0.0
    %858 = vadd.xlane.f32.xlu0 %v857
    %v859 = vpop.xlane.xlu0 %858
    %v860 = vsel %vm809, %v840, 0.0
    %861 = vadd.xlane.f32.xlu0 %v860
    %v862 = vpop.xlane.xlu0 %861
    %v863 = vsel %vm809, %v841, 0.0
    %864 = vadd.xlane.f32.xlu0 %v863
    %v865 = vpop.xlane.xlu0 %864
    %v866 = vsel %vm800, %v791, 0.0
    %v867 = vsel %vm800, %v792, 0.0
    %v868 = vsel %vm800, %v793, 0.0
    %v869 = vsel %vm800, %v794, 0.0
    %v870 = vsel %vm800, %v795, 0.0
    %v871 = vsel %vm800, %v796, 0.0
    %v872 = vsel %vm800, %v797, 0.0
    %v873 = vsel %vm800, %v798, 0.0
    %v874 = vsel %vm809, %v866, 0.0
    %875 = vadd.xlane.f32.xlu0 %v874
    %v876 = vpop.xlane.xlu0 %875
    %v877 = vsel %vm809, %v867, 0.0
    %878 = vadd.xlane.f32.xlu0 %v877
    %v879 = vpop.xlane.xlu0 %878
    %v880 = vsel %vm809, %v868, 0.0
    %881 = vadd.xlane.f32.xlu0 %v880
    %v882 = vpop.xlane.xlu0 %881
    %v883 = vsel %vm809, %v869, 0.0
    %884 = vadd.xlane.f32.xlu0 %v883
    %v885 = vpop.xlane.xlu0 %884
    %v886 = vsel %vm809, %v870, 0.0
    %887 = vadd.xlane.f32.xlu0 %v886
    %v888 = vpop.xlane.xlu0 %887
    %v889 = vsel %vm809, %v871, 0.0
    %890 = vadd.xlane.f32.xlu0 %v889
    %v891 = vpop.xlane.xlu0 %890
    %v892 = vsel %vm809, %v872, 0.0
    %893 = vadd.xlane.f32.xlu0 %v892
    %v894 = vpop.xlane.xlu0 %893
    %v895 = vsel %vm809, %v873, 0.0
    %896 = vadd.xlane.f32.xlu0 %v895
    %v897 = vpop.xlane.xlu0 %896
    %v898 = vsel %vm800, 0.0, %v791
    %v899 = vsel %vm800, 0.0, %v792
    %v900 = vsel %vm800, 0.0, %v793
    %v901 = vsel %vm800, 0.0, %v794
    %v902 = vsel %vm800, 0.0, %v795
    %v903 = vsel %vm800, 0.0, %v796
    %v904 = vsel %vm800, 0.0, %v797
    %v905 = vsel %vm800, 0.0, %v798
    %v906 = vsel %vm809, %v898, 0.0
    %907 = vadd.xlane.f32.xlu0 %v906
    %v908 = vpop.xlane.xlu0 %907
    %v909 = vsel %vm809, %v899, 0.0
    %910 = vadd.xlane.f32.xlu0 %v909
    %v911 = vpop.xlane.xlu0 %910
    %v912 = vsel %vm809, %v900, 0.0
    %913 = vadd.xlane.f32.xlu0 %v912
    %v914 = vpop.xlane.xlu0 %913
    %v915 = vsel %vm809, %v901, 0.0
    %916 = vadd.xlane.f32.xlu0 %v915
    %v917 = vpop.xlane.xlu0 %916
    %v918 = vsel %vm809, %v902, 0.0
    %919 = vadd.xlane.f32.xlu0 %v918
    %v920 = vpop.xlane.xlu0 %919
    %v921 = vsel %vm809, %v903, 0.0
    %922 = vadd.xlane.f32.xlu0 %v921
    %v923 = vpop.xlane.xlu0 %922
    %v924 = vsel %vm809, %v904, 0.0
    %925 = vadd.xlane.f32.xlu0 %v924
    %v926 = vpop.xlane.xlu0 %925
    %v927 = vsel %vm809, %v905, 0.0
    %928 = vadd.xlane.f32.xlu0 %v927
    %v929 = vpop.xlane.xlu0 %928
    %v930 = vmul.f32 %v812, 0.03125
    %v931 = vmul.f32 %v815, 0.03125
    %v932 = vmul.f32 %v818, 0.03125
    %v933 = vmul.f32 %v821, 0.03125
    %v934 = vmul.f32 %v824, 0.03125
    %v935 = vmul.f32 %v827, 0.03125
    %v936 = vmul.f32 %v830, 0.03125
    %v937 = vmul.f32 %v833, 0.03125
    %v938 = vmul.f32 %v844, 0.03125
    %v939 = vmul.f32 %v847, 0.03125
    %v940 = vmul.f32 %v850, 0.03125
    %v941 = vmul.f32 %v853, 0.03125
    %v942 = vmul.f32 %v856, 0.03125
    %v943 = vmul.f32 %v859, 0.03125
    %v944 = vmul.f32 %v862, 0.03125
    %v945 = vmul.f32 %v865, 0.03125
    %v946 = vsel %vm800, %v930, %v938
    %v947 = vsel %vm800, %v931, %v939
    %v948 = vsel %vm800, %v932, %v940
    %v949 = vsel %vm800, %v933, %v941
    %v950 = vsel %vm800, %v934, %v942
    %v951 = vsel %vm800, %v935, %v943
    %v952 = vsel %vm800, %v936, %v944
    %v953 = vsel %vm800, %v937, %v945
    %v954 = vmul.f32 %v876, 0.03125
    %v955 = vmul.f32 %v879, 0.03125
    %v956 = vmul.f32 %v882, 0.03125
    %v957 = vmul.f32 %v885, 0.03125
    %v958 = vmul.f32 %v888, 0.03125
    %v959 = vmul.f32 %v891, 0.03125
    %v960 = vmul.f32 %v894, 0.03125
    %v961 = vmul.f32 %v897, 0.03125
    %v962 = vmul.f32 %v908, 0.03125
    %v963 = vmul.f32 %v911, 0.03125
    %v964 = vmul.f32 %v914, 0.03125
    %v965 = vmul.f32 %v917, 0.03125
    %v966 = vmul.f32 %v920, 0.03125
    %v967 = vmul.f32 %v923, 0.03125
    %v968 = vmul.f32 %v926, 0.03125
    %v969 = vmul.f32 %v929, 0.03125
    %v970 = vsel %vm800, %v954, %v962
    %v971 = vsel %vm800, %v955, %v963
    %v972 = vsel %vm800, %v956, %v964
    %v973 = vsel %vm800, %v957, %v965
    %v974 = vsel %vm800, %v958, %v966
    %v975 = vsel %vm800, %v959, %v967
    %v976 = vsel %vm800, %v960, %v968
    %v977 = vsel %vm800, %v961, %v969
    %v978 = vld [vmem:[%s3] sm:$0xff]
    %v979 = vld [vmem:[%s3 + $0x8] sm:$0xff]
    %v980 = vld [vmem:[%s3 + $0x10] sm:$0xff]
    %v981 = vld [vmem:[%s3 + $0x18] sm:$0xff]
    %v982 = vld [vmem:[%s3 + $0x20] sm:$0xff]
    %v983 = vld [vmem:[%s3 + $0x28] sm:$0xff]
    %v984 = vld [vmem:[%s3 + $0x30] sm:$0xff]
    %v985 = vld [vmem:[%s3 + $0x38] sm:$0xff]
    %vm986 = vcmask 523264
    %v988 = vsel %vm986, %v978, 0
    %v991 = vsel %vm986, %v979, 0
    %v994 = vsel %vm986, %v980, 0
    %v997 = vsel %vm986, %v981, 0
    %v1000 = vsel %vm986, %v982, 0
    %v1003 = vsel %vm986, %v983, 0
    %v1006 = vsel %vm986, %v984, 0
    %v1009 = vsel %vm986, %v985, 0
    %1011 = vmatpush.msra.mxu0 0.0
    %1012 = vmatpush.msra.mxu0 0.0
    %1013 = vmatpush.msra.mxu0 0.0
    %1014 = vmatpush.msra.mxu0 0.0
    %1015 = vmatpush.msra.mxu0 0.0
    %1016 = vmatpush.msra.mxu0 0.0
    %1017 = vmatpush.msra.mxu0 0.0
    %1018 = vmatpush.msra.mxu0 0.0
    %1019 = vmatpush.msra.mxu0 %v953
    %1020 = vmatpush.msra.mxu0 %v952
    %1021 = vmatpush.msra.mxu0 %v951
    %1022 = vmatpush.msra.mxu0 %v950
    %1023 = vmatpush.msra.mxu0 %v949
    %1024 = vmatpush.msra.mxu0 %v948
    %1025 = vmatpush.msra.mxu0 %v947
    %1026 = vmatpush.msra.mxu0 %v946
    %1027 = vmatmul.f32.gmra.mxu0 %v988
    %v1028 = vpop.f32.mrf.mxu0
    %v1029 = vadd.f32 0.0, %v1028
    %1030 = vmatmul.f32.gmra.mxu0 %v991
    %v1031 = vpop.f32.mrf.mxu0
    %v1032 = vadd.f32 0.0, %v1031
    %1033 = vmatmul.f32.gmra.mxu0 %v994
    %v1034 = vpop.f32.mrf.mxu0
    %v1035 = vadd.f32 0.0, %v1034
    %1036 = vmatmul.f32.gmra.mxu0 %v997
    %v1037 = vpop.f32.mrf.mxu0
    %v1038 = vadd.f32 0.0, %v1037
    %1039 = vmatmul.f32.gmra.mxu0 %v1000
    %v1040 = vpop.f32.mrf.mxu0
    %v1041 = vadd.f32 0.0, %v1040
    %1042 = vmatmul.f32.gmra.mxu0 %v1003
    %v1043 = vpop.f32.mrf.mxu0
    %v1044 = vadd.f32 0.0, %v1043
    %1045 = vmatmul.f32.gmra.mxu0 %v1006
    %v1046 = vpop.f32.mrf.mxu0
    %v1047 = vadd.f32 0.0, %v1046
    %1048 = vmatmul.f32.gmra.mxu0 %v1009
    %v1049 = vpop.f32.mrf.mxu0
    %v1050 = vadd.f32 0.0, %v1049
    %1051 = vdwg.mxu0
    %1052 = vmatpush.msra.mxu0 0.0
    %1053 = vmatpush.msra.mxu0 0.0
    %1054 = vmatpush.msra.mxu0 0.0
    %1055 = vmatpush.msra.mxu0 0.0
    %1056 = vmatpush.msra.mxu0 0.0
    %1057 = vmatpush.msra.mxu0 0.0
    %1058 = vmatpush.msra.mxu0 0.0
    %1059 = vmatpush.msra.mxu0 0.0
    %1060 = vmatpush.msra.mxu0 %v977
    %1061 = vmatpush.msra.mxu0 %v976
    %1062 = vmatpush.msra.mxu0 %v975
    %1063 = vmatpush.msra.mxu0 %v974
    %1064 = vmatpush.msra.mxu0 %v973
    %1065 = vmatpush.msra.mxu0 %v972
    %1066 = vmatpush.msra.mxu0 %v971
    %1067 = vmatpush.msra.mxu0 %v970
    %1068 = vmatmul.f32.gmra.mxu0 %v988
    %v1069 = vpop.f32.mrf.mxu0
    %v1070 = vadd.f32 0.0, %v1069
    %1071 = vmatmul.f32.gmra.mxu0 %v991
    %v1072 = vpop.f32.mrf.mxu0
    %v1073 = vadd.f32 0.0, %v1072
    %1074 = vmatmul.f32.gmra.mxu0 %v994
    %v1075 = vpop.f32.mrf.mxu0
    %v1076 = vadd.f32 0.0, %v1075
    %1077 = vmatmul.f32.gmra.mxu0 %v997
    %v1078 = vpop.f32.mrf.mxu0
    %v1079 = vadd.f32 0.0, %v1078
    %1080 = vmatmul.f32.gmra.mxu0 %v1000
    %v1081 = vpop.f32.mrf.mxu0
    %v1082 = vadd.f32 0.0, %v1081
    %1083 = vmatmul.f32.gmra.mxu0 %v1003
    %v1084 = vpop.f32.mrf.mxu0
    %v1085 = vadd.f32 0.0, %v1084
    %1086 = vmatmul.f32.gmra.mxu0 %v1006
    %v1087 = vpop.f32.mrf.mxu0
    %v1088 = vadd.f32 0.0, %v1087
    %1089 = vmatmul.f32.gmra.mxu0 %v1009
    %v1090 = vpop.f32.mrf.mxu0
    %v1091 = vadd.f32 0.0, %v1090
    %1092 = vdwg.mxu0
    %v1093 = vmul.f32 %v1029, %v1029
    %v1094 = vmul.f32 %v1032, %v1032
    %v1095 = vmul.f32 %v1035, %v1035
    %v1096 = vmul.f32 %v1038, %v1038
    %v1097 = vmul.f32 %v1041, %v1041
    %v1098 = vmul.f32 %v1044, %v1044
    %v1099 = vmul.f32 %v1047, %v1047
    %v1100 = vmul.f32 %v1050, %v1050
    %v1101 = vsub.f32 %v1070, %v1093
    %v1102 = vsub.f32 %v1073, %v1094
    %v1103 = vsub.f32 %v1076, %v1095
    %v1104 = vsub.f32 %v1079, %v1096
    %v1105 = vsub.f32 %v1082, %v1097
    %v1106 = vsub.f32 %v1085, %v1098
    %v1107 = vsub.f32 %v1088, %v1099
    %v1108 = vsub.f32 %v1091, %v1100
    %v1109 = vmax.f32 %v1101, 0.0
    %v1110 = vmax.f32 %v1102, 0.0
    %v1111 = vmax.f32 %v1103, 0.0
    %v1112 = vmax.f32 %v1104, 0.0
    %v1113 = vmax.f32 %v1105, 0.0
    %v1114 = vmax.f32 %v1106, 0.0
    %v1115 = vmax.f32 %v1107, 0.0
    %v1116 = vmax.f32 %v1108, 0.0
    %v1117 = vsub.f32 %v783, %v1029
    %v1118 = vsub.f32 %v784, %v1032
    %v1119 = vsub.f32 %v785, %v1035
    %v1120 = vsub.f32 %v786, %v1038
    %v1121 = vsub.f32 %v787, %v1041
    %v1122 = vsub.f32 %v788, %v1044
    %v1123 = vsub.f32 %v789, %v1047
    %v1124 = vsub.f32 %v790, %v1050
    %v1125 = vadd.f32 %v1109, 1e-05
    %v1126 = vadd.f32 %v1110, 1e-05
    %v1127 = vadd.f32 %v1111, 1e-05
    %v1128 = vadd.f32 %v1112, 1e-05
    %v1129 = vadd.f32 %v1113, 1e-05
    %v1130 = vadd.f32 %v1114, 1e-05
    %v1131 = vadd.f32 %v1115, 1e-05
    %v1132 = vadd.f32 %v1116, 1e-05
    %v1133 = vrsqrt.pop %v1125
    %v1134 = vmul.f32 %v1133, %v1125
    %v1135 = vmul.f32 %v1134, %v1133
    %v1136 = vmul.f32 0.5, %v1135
    %v1137 = vsub.f32 1.5, %v1136
    %v1138 = vmul.f32 %v1133, %v1137
    %vm1139 = vweird.f32 %v1125
    %vm1140 = vweird.f32 %v1133
    %vm1141 = vmor %vm1139, %vm1140
    %v1142 = vsel %vm1141, %v1133, %v1138
    %v1143 = vrsqrt.pop %v1126
    %v1144 = vmul.f32 %v1143, %v1126
    %v1145 = vmul.f32 %v1144, %v1143
    %v1146 = vmul.f32 0.5, %v1145
    %v1147 = vsub.f32 1.5, %v1146
    %v1148 = vmul.f32 %v1143, %v1147
    %vm1149 = vweird.f32 %v1126
    %vm1150 = vweird.f32 %v1143
    %vm1151 = vmor %vm1149, %vm1150
    %v1152 = vsel %vm1151, %v1143, %v1148
    %v1153 = vrsqrt.pop %v1127
    %v1154 = vmul.f32 %v1153, %v1127
    %v1155 = vmul.f32 %v1154, %v1153
    %v1156 = vmul.f32 0.5, %v1155
    %v1157 = vsub.f32 1.5, %v1156
    %v1158 = vmul.f32 %v1153, %v1157
    %vm1159 = vweird.f32 %v1127
    %vm1160 = vweird.f32 %v1153
    %vm1161 = vmor %vm1159, %vm1160
    %v1162 = vsel %vm1161, %v1153, %v1158
    %v1163 = vrsqrt.pop %v1128
    %v1164 = vmul.f32 %v1163, %v1128
    %v1165 = vmul.f32 %v1164, %v1163
    %v1166 = vmul.f32 0.5, %v1165
    %v1167 = vsub.f32 1.5, %v1166
    %v1168 = vmul.f32 %v1163, %v1167
    %vm1169 = vweird.f32 %v1128
    %vm1170 = vweird.f32 %v1163
    %vm1171 = vmor %vm1169, %vm1170
    %v1172 = vsel %vm1171, %v1163, %v1168
    %v1173 = vrsqrt.pop %v1129
    %v1174 = vmul.f32 %v1173, %v1129
    %v1175 = vmul.f32 %v1174, %v1173
    %v1176 = vmul.f32 0.5, %v1175
    %v1177 = vsub.f32 1.5, %v1176
    %v1178 = vmul.f32 %v1173, %v1177
    %vm1179 = vweird.f32 %v1129
    %vm1180 = vweird.f32 %v1173
    %vm1181 = vmor %vm1179, %vm1180
    %v1182 = vsel %vm1181, %v1173, %v1178
    %v1183 = vrsqrt.pop %v1130
    %v1184 = vmul.f32 %v1183, %v1130
    %v1185 = vmul.f32 %v1184, %v1183
    %v1186 = vmul.f32 0.5, %v1185
    %v1187 = vsub.f32 1.5, %v1186
    %v1188 = vmul.f32 %v1183, %v1187
    %vm1189 = vweird.f32 %v1130
    %vm1190 = vweird.f32 %v1183
    %vm1191 = vmor %vm1189, %vm1190
    %v1192 = vsel %vm1191, %v1183, %v1188
    %v1193 = vrsqrt.pop %v1131
    %v1194 = vmul.f32 %v1193, %v1131
    %v1195 = vmul.f32 %v1194, %v1193
    %v1196 = vmul.f32 0.5, %v1195
    %v1197 = vsub.f32 1.5, %v1196
    %v1198 = vmul.f32 %v1193, %v1197
    %vm1199 = vweird.f32 %v1131
    %vm1200 = vweird.f32 %v1193
    %vm1201 = vmor %vm1199, %vm1200
    %v1202 = vsel %vm1201, %v1193, %v1198
    %v1203 = vrsqrt.pop %v1132
    %v1204 = vmul.f32 %v1203, %v1132
    %v1205 = vmul.f32 %v1204, %v1203
    %v1206 = vmul.f32 0.5, %v1205
    %v1207 = vsub.f32 1.5, %v1206
    %v1208 = vmul.f32 %v1203, %v1207
    %vm1209 = vweird.f32 %v1132
    %vm1210 = vweird.f32 %v1203
    %vm1211 = vmor %vm1209, %vm1210
    %v1212 = vsel %vm1211, %v1203, %v1208
    %v1213 = vmul.f32 %v1117, %v1142
    %v1214 = vmul.f32 %v1118, %v1152
    %v1215 = vmul.f32 %v1119, %v1162
    %v1216 = vmul.f32 %v1120, %v1172
    %v1217 = vmul.f32 %v1121, %v1182
    %v1218 = vmul.f32 %v1122, %v1192
    %v1219 = vmul.f32 %v1123, %v1202
    %v1220 = vmul.f32 %v1124, %v1212
    %v1221 = vld [vmem:[%s5] sm:$0xff]
    %v1222 = vld [vmem:[%s5 + $0x8] sm:$0xff]
    %v1223 = vld [vmem:[%s5 + $0x10] sm:$0xff]
    %v1224 = vld [vmem:[%s5 + $0x18] sm:$0xff]
    %v1225 = vld [vmem:[%s5 + $0x20] sm:$0xff]
    %v1226 = vld [vmem:[%s5 + $0x28] sm:$0xff]
    %v1227 = vld [vmem:[%s5 + $0x30] sm:$0xff]
    %v1228 = vld [vmem:[%s5 + $0x38] sm:$0xff]
    %1230 = vset.pattern.permute.xlu0 0
    %1231 = vperm.xlu0 %1230, %v1221
    %v1232 = vpop.permute.xlu0 %1231
    %1235 = vset.pattern.permute.xlu0 0
    %1236 = vperm.xlu0 %1235, %v1222
    %v1237 = vpop.permute.xlu0 %1236
    %1240 = vset.pattern.permute.xlu0 0
    %1241 = vperm.xlu0 %1240, %v1223
    %v1242 = vpop.permute.xlu0 %1241
    %1245 = vset.pattern.permute.xlu0 0
    %1246 = vperm.xlu0 %1245, %v1224
    %v1247 = vpop.permute.xlu0 %1246
    %1250 = vset.pattern.permute.xlu0 0
    %1251 = vperm.xlu0 %1250, %v1225
    %v1252 = vpop.permute.xlu0 %1251
    %1255 = vset.pattern.permute.xlu0 0
    %1256 = vperm.xlu0 %1255, %v1226
    %v1257 = vpop.permute.xlu0 %1256
    %1260 = vset.pattern.permute.xlu0 0
    %1261 = vperm.xlu0 %1260, %v1227
    %v1262 = vpop.permute.xlu0 %1261
    %1265 = vset.pattern.permute.xlu0 0
    %1266 = vperm.xlu0 %1265, %v1228
    %v1267 = vpop.permute.xlu0 %1266
    %v1269 = vmul.f32 %v1213, %v1232
    %v1270 = vmul.f32 %v1214, %v1237
    %v1271 = vmul.f32 %v1215, %v1242
    %v1272 = vmul.f32 %v1216, %v1247
    %v1273 = vmul.f32 %v1217, %v1252
    %v1274 = vmul.f32 %v1218, %v1257
    %v1275 = vmul.f32 %v1219, %v1262
    %v1276 = vmul.f32 %v1220, %v1267
    %v1277 = vld [vmem:[%s6] sm:$0xff]
    %v1278 = vld [vmem:[%s6 + $0x8] sm:$0xff]
    %v1279 = vld [vmem:[%s6 + $0x10] sm:$0xff]
    %v1280 = vld [vmem:[%s6 + $0x18] sm:$0xff]
    %v1281 = vld [vmem:[%s6 + $0x20] sm:$0xff]
    %v1282 = vld [vmem:[%s6 + $0x28] sm:$0xff]
    %v1283 = vld [vmem:[%s6 + $0x30] sm:$0xff]
    %v1284 = vld [vmem:[%s6 + $0x38] sm:$0xff]
    %1286 = vset.pattern.permute.xlu0 0
    %1287 = vperm.xlu0 %1286, %v1277
    %v1288 = vpop.permute.xlu0 %1287
    %1291 = vset.pattern.permute.xlu0 0
    %1292 = vperm.xlu0 %1291, %v1278
    %v1293 = vpop.permute.xlu0 %1292
    %1296 = vset.pattern.permute.xlu0 0
    %1297 = vperm.xlu0 %1296, %v1279
    %v1298 = vpop.permute.xlu0 %1297
    %1301 = vset.pattern.permute.xlu0 0
    %1302 = vperm.xlu0 %1301, %v1280
    %v1303 = vpop.permute.xlu0 %1302
    %1306 = vset.pattern.permute.xlu0 0
    %1307 = vperm.xlu0 %1306, %v1281
    %v1308 = vpop.permute.xlu0 %1307
    %1311 = vset.pattern.permute.xlu0 0
    %1312 = vperm.xlu0 %1311, %v1282
    %v1313 = vpop.permute.xlu0 %1312
    %1316 = vset.pattern.permute.xlu0 0
    %1317 = vperm.xlu0 %1316, %v1283
    %v1318 = vpop.permute.xlu0 %1317
    %1321 = vset.pattern.permute.xlu0 0
    %1322 = vperm.xlu0 %1321, %v1284
    %v1323 = vpop.permute.xlu0 %1322
    %v1325 = vadd.f32 %v1269, %v1288
    %v1326 = vadd.f32 %v1270, %v1293
    %v1327 = vadd.f32 %v1271, %v1298
    %v1328 = vadd.f32 %v1272, %v1303
    %v1329 = vadd.f32 %v1273, %v1308
    %v1330 = vadd.f32 %v1274, %v1313
    %v1331 = vadd.f32 %v1275, %v1318
    %v1332 = vadd.f32 %v1276, %v1323
    %v1333 = vxor.u32 %v1325, 2147483648
    %v1334 = vxor.u32 %v1326, 2147483648
    %v1335 = vxor.u32 %v1327, 2147483648
    %v1336 = vxor.u32 %v1328, 2147483648
    %v1337 = vxor.u32 %v1329, 2147483648
    %v1338 = vxor.u32 %v1330, 2147483648
    %v1339 = vxor.u32 %v1331, 2147483648
    %v1340 = vxor.u32 %v1332, 2147483648
    %v1341 = vmul.f32 %v1333, 1.442695
    %v1342 = vpow.pop %v1341
    %v1343 = vmul.f32 %v1334, 1.442695
    %v1344 = vpow.pop %v1343
    %v1345 = vmul.f32 %v1335, 1.442695
    %v1346 = vpow.pop %v1345
    %v1347 = vmul.f32 %v1336, 1.442695
    %v1348 = vpow.pop %v1347
    %v1349 = vmul.f32 %v1337, 1.442695
    %v1350 = vpow.pop %v1349
    %v1351 = vmul.f32 %v1338, 1.442695
    %v1352 = vpow.pop %v1351
    %v1353 = vmul.f32 %v1339, 1.442695
    %v1354 = vpow.pop %v1353
    %v1355 = vmul.f32 %v1340, 1.442695
    %v1356 = vpow.pop %v1355
    %v1357 = vadd.f32 %v1342, 1.0
    %v1358 = vadd.f32 %v1344, 1.0
    %v1359 = vadd.f32 %v1346, 1.0
    %v1360 = vadd.f32 %v1348, 1.0
    %v1361 = vadd.f32 %v1350, 1.0
    %v1362 = vadd.f32 %v1352, 1.0
    %v1363 = vadd.f32 %v1354, 1.0
    %v1364 = vadd.f32 %v1356, 1.0
    %v1365 = vrcp.pop %v1357
    %v1366 = vmul.f32 %v1357, %v1365
    %v1367 = vsub.f32 1.0, %v1366
    %v1368 = vmul.f32 %v1365, %v1367
    %v1369 = vadd.f32 %v1365, %v1368
    %vm1370 = vweird.f32 %v1357
    %vm1371 = vweird.f32 %v1365
    %vm1372 = vmor %vm1370, %vm1371
    %v1373 = vsel %vm1372, %v1365, %v1369
    %v1374 = vand.u32 2147483647, %v1357
    %vm1375 = vcmp.eq.f32.partialorder %v1374, 8.507059e+37
    %v1376 = vand.u32 %v1357, 2147483648
    %v1377 = vor.u32 1.1754944e-38, %v1376
    %v1378 = vsel %vm1375, %v1377, %v1373
    %v1379 = vmul.f32 1.0, %v1378
    %v1380 = vrcp.pop %v1358
    %v1381 = vmul.f32 %v1358, %v1380
    %v1382 = vsub.f32 1.0, %v1381
    %v1383 = vmul.f32 %v1380, %v1382
    %v1384 = vadd.f32 %v1380, %v1383
    %vm1385 = vweird.f32 %v1358
    %vm1386 = vweird.f32 %v1380
    %vm1387 = vmor %vm1385, %vm1386
    %v1388 = vsel %vm1387, %v1380, %v1384
    %v1389 = vand.u32 2147483647, %v1358
    %vm1390 = vcmp.eq.f32.partialorder %v1389, 8.507059e+37
    %v1391 = vand.u32 %v1358, 2147483648
    %v1392 = vor.u32 1.1754944e-38, %v1391
    %v1393 = vsel %vm1390, %v1392, %v1388
    %v1394 = vmul.f32 1.0, %v1393
    %v1395 = vrcp.pop %v1359
    %v1396 = vmul.f32 %v1359, %v1395
    %v1397 = vsub.f32 1.0, %v1396
    %v1398 = vmul.f32 %v1395, %v1397
    %v1399 = vadd.f32 %v1395, %v1398
    %vm1400 = vweird.f32 %v1359
    %vm1401 = vweird.f32 %v1395
    %vm1402 = vmor %vm1400, %vm1401
    %v1403 = vsel %vm1402, %v1395, %v1399
    %v1404 = vand.u32 2147483647, %v1359
    %vm1405 = vcmp.eq.f32.partialorder %v1404, 8.507059e+37
    %v1406 = vand.u32 %v1359, 2147483648
    %v1407 = vor.u32 1.1754944e-38, %v1406
    %v1408 = vsel %vm1405, %v1407, %v1403
    %v1409 = vmul.f32 1.0, %v1408
    %v1410 = vrcp.pop %v1360
    %v1411 = vmul.f32 %v1360, %v1410
    %v1412 = vsub.f32 1.0, %v1411
    %v1413 = vmul.f32 %v1410, %v1412
    %v1414 = vadd.f32 %v1410, %v1413
    %vm1415 = vweird.f32 %v1360
    %vm1416 = vweird.f32 %v1410
    %vm1417 = vmor %vm1415, %vm1416
    %v1418 = vsel %vm1417, %v1410, %v1414
    %v1419 = vand.u32 2147483647, %v1360
    %vm1420 = vcmp.eq.f32.partialorder %v1419, 8.507059e+37
    %v1421 = vand.u32 %v1360, 2147483648
    %v1422 = vor.u32 1.1754944e-38, %v1421
    %v1423 = vsel %vm1420, %v1422, %v1418
    %v1424 = vmul.f32 1.0, %v1423
    %v1425 = vrcp.pop %v1361
    %v1426 = vmul.f32 %v1361, %v1425
    %v1427 = vsub.f32 1.0, %v1426
    %v1428 = vmul.f32 %v1425, %v1427
    %v1429 = vadd.f32 %v1425, %v1428
    %vm1430 = vweird.f32 %v1361
    %vm1431 = vweird.f32 %v1425
    %vm1432 = vmor %vm1430, %vm1431
    %v1433 = vsel %vm1432, %v1425, %v1429
    %v1434 = vand.u32 2147483647, %v1361
    %vm1435 = vcmp.eq.f32.partialorder %v1434, 8.507059e+37
    %v1436 = vand.u32 %v1361, 2147483648
    %v1437 = vor.u32 1.1754944e-38, %v1436
    %v1438 = vsel %vm1435, %v1437, %v1433
    %v1439 = vmul.f32 1.0, %v1438
    %v1440 = vrcp.pop %v1362
    %v1441 = vmul.f32 %v1362, %v1440
    %v1442 = vsub.f32 1.0, %v1441
    %v1443 = vmul.f32 %v1440, %v1442
    %v1444 = vadd.f32 %v1440, %v1443
    %vm1445 = vweird.f32 %v1362
    %vm1446 = vweird.f32 %v1440
    %vm1447 = vmor %vm1445, %vm1446
    %v1448 = vsel %vm1447, %v1440, %v1444
    %v1449 = vand.u32 2147483647, %v1362
    %vm1450 = vcmp.eq.f32.partialorder %v1449, 8.507059e+37
    %v1451 = vand.u32 %v1362, 2147483648
    %v1452 = vor.u32 1.1754944e-38, %v1451
    %v1453 = vsel %vm1450, %v1452, %v1448
    %v1454 = vmul.f32 1.0, %v1453
    %v1455 = vrcp.pop %v1363
    %v1456 = vmul.f32 %v1363, %v1455
    %v1457 = vsub.f32 1.0, %v1456
    %v1458 = vmul.f32 %v1455, %v1457
    %v1459 = vadd.f32 %v1455, %v1458
    %vm1460 = vweird.f32 %v1363
    %vm1461 = vweird.f32 %v1455
    %vm1462 = vmor %vm1460, %vm1461
    %v1463 = vsel %vm1462, %v1455, %v1459
    %v1464 = vand.u32 2147483647, %v1363
    %vm1465 = vcmp.eq.f32.partialorder %v1464, 8.507059e+37
    %v1466 = vand.u32 %v1363, 2147483648
    %v1467 = vor.u32 1.1754944e-38, %v1466
    %v1468 = vsel %vm1465, %v1467, %v1463
    %v1469 = vmul.f32 1.0, %v1468
    %v1470 = vrcp.pop %v1364
    %v1471 = vmul.f32 %v1364, %v1470
    %v1472 = vsub.f32 1.0, %v1471
    %v1473 = vmul.f32 %v1470, %v1472
    %v1474 = vadd.f32 %v1470, %v1473
    %vm1475 = vweird.f32 %v1364
    %vm1476 = vweird.f32 %v1470
    %vm1477 = vmor %vm1475, %vm1476
    %v1478 = vsel %vm1477, %v1470, %v1474
    %v1479 = vand.u32 2147483647, %v1364
    %vm1480 = vcmp.eq.f32.partialorder %v1479, 8.507059e+37
    %v1481 = vand.u32 %v1364, 2147483648
    %v1482 = vor.u32 1.1754944e-38, %v1481
    %v1483 = vsel %vm1480, %v1482, %v1478
    %v1484 = vmul.f32 1.0, %v1483
    %v1485 = vld [vmem:[%s2] sm:$0xff]
    %v1486 = vld [vmem:[%s2 + $0x8] sm:$0xff]
    %v1487 = vld [vmem:[%s2 + $0x10] sm:$0xff]
    %v1488 = vld [vmem:[%s2 + $0x18] sm:$0xff]
    %v1489 = vld [vmem:[%s2 + $0x20] sm:$0xff]
    %v1490 = vld [vmem:[%s2 + $0x28] sm:$0xff]
    %v1491 = vld [vmem:[%s2 + $0x30] sm:$0xff]
    %v1492 = vld [vmem:[%s2 + $0x38] sm:$0xff]
    %v1493 = vld [vmem:[%s2 + $0x40] sm:$0xff]
    %v1494 = vld [vmem:[%s2 + $0x48] sm:$0xff]
    %v1495 = vld [vmem:[%s2 + $0x50] sm:$0xff]
    %v1496 = vld [vmem:[%s2 + $0x58] sm:$0xff]
    %v1497 = vld [vmem:[%s2 + $0x60] sm:$0xff]
    %v1498 = vld [vmem:[%s2 + $0x68] sm:$0xff]
    %v1499 = vld [vmem:[%s2 + $0x70] sm:$0xff]
    %v1500 = vld [vmem:[%s2 + $0x78] sm:$0xff]
    %v1502 = vsel %vm809, %v1379, 0
    %v1505 = vsel %vm809, %v1394, 0
    %v1508 = vsel %vm809, %v1409, 0
    %v1511 = vsel %vm809, %v1424, 0
    %v1514 = vsel %vm809, %v1439, 0
    %v1517 = vsel %vm809, %v1454, 0
    %v1520 = vsel %vm809, %v1469, 0
    %v1523 = vsel %vm809, %v1484, 0
    %1525 = vmatpush.msra.mxu0 0.0
    %1526 = vmatpush.msra.mxu0 0.0
    %1527 = vmatpush.msra.mxu0 0.0
    %1528 = vmatpush.msra.mxu0 0.0
    %1529 = vmatpush.msra.mxu0 0.0
    %1530 = vmatpush.msra.mxu0 0.0
    %1531 = vmatpush.msra.mxu0 0.0
    %1532 = vmatpush.msra.mxu0 0.0
    %1533 = vmatpush.msra.mxu0 0.0
    %1534 = vmatpush.msra.mxu0 0.0
    %1535 = vmatpush.msra.mxu0 0.0
    %1536 = vmatpush.msra.mxu0 0.0
    %1537 = vmatpush.msra.mxu0 %v1497
    %1538 = vmatpush.msra.mxu0 %v1493
    %1539 = vmatpush.msra.mxu0 %v1489
    %1540 = vmatpush.msra.mxu0 %v1485
    %1541 = vmatmul.f32.gmra.mxu0 %v1502
    %v1542 = vpop.f32.mrf.mxu0
    %v1543 = vadd.f32 0.0, %v1542
    %1544 = vmatmul.f32.gmra.mxu0 %v1505
    %v1545 = vpop.f32.mrf.mxu0
    %v1546 = vadd.f32 0.0, %v1545
    %1547 = vmatmul.f32.gmra.mxu0 %v1508
    %v1548 = vpop.f32.mrf.mxu0
    %v1549 = vadd.f32 0.0, %v1548
    %1550 = vmatmul.f32.gmra.mxu0 %v1511
    %v1551 = vpop.f32.mrf.mxu0
    %v1552 = vadd.f32 0.0, %v1551
    %1553 = vmatmul.f32.gmra.mxu0 %v1514
    %v1554 = vpop.f32.mrf.mxu0
    %v1555 = vadd.f32 0.0, %v1554
    %1556 = vmatmul.f32.gmra.mxu0 %v1517
    %v1557 = vpop.f32.mrf.mxu0
    %v1558 = vadd.f32 0.0, %v1557
    %1559 = vmatmul.f32.gmra.mxu0 %v1520
    %v1560 = vpop.f32.mrf.mxu0
    %v1561 = vadd.f32 0.0, %v1560
    %1562 = vmatmul.f32.gmra.mxu0 %v1523
    %v1563 = vpop.f32.mrf.mxu0
    %v1564 = vadd.f32 0.0, %v1563
    %1565 = vdwg.mxu0
    %1566 = vmatpush.msra.mxu0 0.0
    %1567 = vmatpush.msra.mxu0 0.0
    %1568 = vmatpush.msra.mxu0 0.0
    %1569 = vmatpush.msra.mxu0 0.0
    %1570 = vmatpush.msra.mxu0 0.0
    %1571 = vmatpush.msra.mxu0 0.0
    %1572 = vmatpush.msra.mxu0 0.0
    %1573 = vmatpush.msra.mxu0 0.0
    %1574 = vmatpush.msra.mxu0 0.0
    %1575 = vmatpush.msra.mxu0 0.0
    %1576 = vmatpush.msra.mxu0 0.0
    %1577 = vmatpush.msra.mxu0 0.0
    %1578 = vmatpush.msra.mxu0 %v1498
    %1579 = vmatpush.msra.mxu0 %v1494
    %1580 = vmatpush.msra.mxu0 %v1490
    %1581 = vmatpush.msra.mxu0 %v1486
    %1582 = vmatmul.f32.gmra.mxu0 %v1502
    %v1583 = vpop.f32.mrf.mxu0
    %v1584 = vadd.f32 0.0, %v1583
    %1585 = vmatmul.f32.gmra.mxu0 %v1505
    %v1586 = vpop.f32.mrf.mxu0
    %v1587 = vadd.f32 0.0, %v1586
    %1588 = vmatmul.f32.gmra.mxu0 %v1508
    %v1589 = vpop.f32.mrf.mxu0
    %v1590 = vadd.f32 0.0, %v1589
    %1591 = vmatmul.f32.gmra.mxu0 %v1511
    %v1592 = vpop.f32.mrf.mxu0
    %v1593 = vadd.f32 0.0, %v1592
    %1594 = vmatmul.f32.gmra.mxu0 %v1514
    %v1595 = vpop.f32.mrf.mxu0
    %v1596 = vadd.f32 0.0, %v1595
    %1597 = vmatmul.f32.gmra.mxu0 %v1517
    %v1598 = vpop.f32.mrf.mxu0
    %v1599 = vadd.f32 0.0, %v1598
    %1600 = vmatmul.f32.gmra.mxu0 %v1520
    %v1601 = vpop.f32.mrf.mxu0
    %v1602 = vadd.f32 0.0, %v1601
    %1603 = vmatmul.f32.gmra.mxu0 %v1523
    %v1604 = vpop.f32.mrf.mxu0
    %v1605 = vadd.f32 0.0, %v1604
    %1606 = vdwg.mxu0
    %1607 = vmatpush.msra.mxu0 0.0
    %1608 = vmatpush.msra.mxu0 0.0
    %1609 = vmatpush.msra.mxu0 0.0
    %1610 = vmatpush.msra.mxu0 0.0
    %1611 = vmatpush.msra.mxu0 0.0
    %1612 = vmatpush.msra.mxu0 0.0
    %1613 = vmatpush.msra.mxu0 0.0
    %1614 = vmatpush.msra.mxu0 0.0
    %1615 = vmatpush.msra.mxu0 0.0
    %1616 = vmatpush.msra.mxu0 0.0
    %1617 = vmatpush.msra.mxu0 0.0
    %1618 = vmatpush.msra.mxu0 0.0
    %1619 = vmatpush.msra.mxu0 %v1499
    %1620 = vmatpush.msra.mxu0 %v1495
    %1621 = vmatpush.msra.mxu0 %v1491
    %1622 = vmatpush.msra.mxu0 %v1487
    %1623 = vmatmul.f32.gmra.mxu0 %v1502
    %v1624 = vpop.f32.mrf.mxu0
    %v1625 = vadd.f32 0.0, %v1624
    %1626 = vmatmul.f32.gmra.mxu0 %v1505
    %v1627 = vpop.f32.mrf.mxu0
    %v1628 = vadd.f32 0.0, %v1627
    %1629 = vmatmul.f32.gmra.mxu0 %v1508
    %v1630 = vpop.f32.mrf.mxu0
    %v1631 = vadd.f32 0.0, %v1630
    %1632 = vmatmul.f32.gmra.mxu0 %v1511
    %v1633 = vpop.f32.mrf.mxu0
    %v1634 = vadd.f32 0.0, %v1633
    %1635 = vmatmul.f32.gmra.mxu0 %v1514
    %v1636 = vpop.f32.mrf.mxu0
    %v1637 = vadd.f32 0.0, %v1636
    %1638 = vmatmul.f32.gmra.mxu0 %v1517
    %v1639 = vpop.f32.mrf.mxu0
    %v1640 = vadd.f32 0.0, %v1639
    %1641 = vmatmul.f32.gmra.mxu0 %v1520
    %v1642 = vpop.f32.mrf.mxu0
    %v1643 = vadd.f32 0.0, %v1642
    %1644 = vmatmul.f32.gmra.mxu0 %v1523
    %v1645 = vpop.f32.mrf.mxu0
    %v1646 = vadd.f32 0.0, %v1645
    %1647 = vdwg.mxu0
    %1648 = vmatpush.msra.mxu0 0.0
    %1649 = vmatpush.msra.mxu0 0.0
    %1650 = vmatpush.msra.mxu0 0.0
    %1651 = vmatpush.msra.mxu0 0.0
    %1652 = vmatpush.msra.mxu0 0.0
    %1653 = vmatpush.msra.mxu0 0.0
    %1654 = vmatpush.msra.mxu0 0.0
    %1655 = vmatpush.msra.mxu0 0.0
    %1656 = vmatpush.msra.mxu0 0.0
    %1657 = vmatpush.msra.mxu0 0.0
    %1658 = vmatpush.msra.mxu0 0.0
    %1659 = vmatpush.msra.mxu0 0.0
    %1660 = vmatpush.msra.mxu0 %v1500
    %1661 = vmatpush.msra.mxu0 %v1496
    %1662 = vmatpush.msra.mxu0 %v1492
    %1663 = vmatpush.msra.mxu0 %v1488
    %1664 = vmatmul.f32.gmra.mxu0 %v1502
    %v1665 = vpop.f32.mrf.mxu0
    %v1666 = vadd.f32 0.0, %v1665
    %1667 = vmatmul.f32.gmra.mxu0 %v1505
    %v1668 = vpop.f32.mrf.mxu0
    %v1669 = vadd.f32 0.0, %v1668
    %1670 = vmatmul.f32.gmra.mxu0 %v1508
    %v1671 = vpop.f32.mrf.mxu0
    %v1672 = vadd.f32 0.0, %v1671
    %1673 = vmatmul.f32.gmra.mxu0 %v1511
    %v1674 = vpop.f32.mrf.mxu0
    %v1675 = vadd.f32 0.0, %v1674
    %1676 = vmatmul.f32.gmra.mxu0 %v1514
    %v1677 = vpop.f32.mrf.mxu0
    %v1678 = vadd.f32 0.0, %v1677
    %1679 = vmatmul.f32.gmra.mxu0 %v1517
    %v1680 = vpop.f32.mrf.mxu0
    %v1681 = vadd.f32 0.0, %v1680
    %1682 = vmatmul.f32.gmra.mxu0 %v1520
    %v1683 = vpop.f32.mrf.mxu0
    %v1684 = vadd.f32 0.0, %v1683
    %1685 = vmatmul.f32.gmra.mxu0 %v1523
    %v1686 = vpop.f32.mrf.mxu0
    %v1687 = vadd.f32 0.0, %v1686
    %1688 = vdwg.mxu0
    %v1689 = vmul.f32 %v1543, %v1625
    %v1690 = vmul.f32 %v1584, %v1666
    %v1691 = vmul.f32 %v1546, %v1628
    %v1692 = vmul.f32 %v1587, %v1669
    %v1693 = vmul.f32 %v1549, %v1631
    %v1694 = vmul.f32 %v1590, %v1672
    %v1695 = vmul.f32 %v1552, %v1634
    %v1696 = vmul.f32 %v1593, %v1675
    %v1697 = vmul.f32 %v1555, %v1637
    %v1698 = vmul.f32 %v1596, %v1678
    %v1699 = vmul.f32 %v1558, %v1640
    %v1700 = vmul.f32 %v1599, %v1681
    %v1701 = vmul.f32 %v1561, %v1643
    %v1702 = vmul.f32 %v1602, %v1684
    %v1703 = vmul.f32 %v1564, %v1646
    %v1704 = vmul.f32 %v1605, %v1687
    %v1705 = vmul.f32 %v27, %v1689
    %v1706 = vmul.f32 %v28, %v1690
    %v1707 = vmul.f32 %v29, %v1691
    %v1708 = vmul.f32 %v30, %v1692
    %v1709 = vmul.f32 %v31, %v1693
    %v1710 = vmul.f32 %v32, %v1694
    %v1711 = vmul.f32 %v33, %v1695
    %v1712 = vmul.f32 %v34, %v1696
    %v1713 = vmul.f32 %v35, %v1697
    %v1714 = vmul.f32 %v36, %v1698
    %v1715 = vmul.f32 %v37, %v1699
    %v1716 = vmul.f32 %v38, %v1700
    %v1717 = vmul.f32 %v39, %v1701
    %v1718 = vmul.f32 %v40, %v1702
    %v1719 = vmul.f32 %v41, %v1703
    %v1720 = vmul.f32 %v42, %v1704
    %1721 = vst [vmem:[#allocation2] sm:$0xff] %v1705
    %1722 = vst [vmem:[#allocation2 + $0x8] sm:$0xff] %v1706
    %1723 = vst [vmem:[#allocation2 + $0x10] sm:$0xff] %v1707
    %1724 = vst [vmem:[#allocation2 + $0x18] sm:$0xff] %v1708
    %1725 = vst [vmem:[#allocation2 + $0x20] sm:$0xff] %v1709
    %1726 = vst [vmem:[#allocation2 + $0x28] sm:$0xff] %v1710
    %1727 = vst [vmem:[#allocation2 + $0x30] sm:$0xff] %v1711
    %1728 = vst [vmem:[#allocation2 + $0x38] sm:$0xff] %v1712
    %1729 = vst [vmem:[#allocation2 + $0x40] sm:$0xff] %v1713
    %1730 = vst [vmem:[#allocation2 + $0x48] sm:$0xff] %v1714
    %1731 = vst [vmem:[#allocation2 + $0x50] sm:$0xff] %v1715
    %1732 = vst [vmem:[#allocation2 + $0x58] sm:$0xff] %v1716
    %1733 = vst [vmem:[#allocation2 + $0x60] sm:$0xff] %v1717
    %1734 = vst [vmem:[#allocation2 + $0x68] sm:$0xff] %v1718
    %1735 = vst [vmem:[#allocation2 + $0x70] sm:$0xff] %v1719
    %1736 = vst [vmem:[#allocation2 + $0x78] sm:$0xff] %v1720
    // Predicated region
    $region30: #{tpu_custom_call.1} parent=1 // pred_check
      _
    $region31: #{tpu_custom_call.1} parent=1 // pred_check_branch
      %1738 = sbr.rel (0) target = $region33
    $region32: #{tpu_custom_call.1} parent=1 // pred_region
      %1740 = vsyncadd [#allocation3], 0
      %s1741 = sshll.u32 [#allocation2], 4
      %s1742 = int_to_ptr.vmem [resolvable:$true] %s1741
      %s1743 = sshll.u32 %s7, 4
      %s1744 = int_to_ptr.hbm [resolvable:$true] %s1743
      %1749 = dma.vmem_to_hbm [thread:$0]  %s1742, 2048, %s1744, [#allocation3], 256, 256, 16
    $region33: #{tpu_custom_call.1} parent=1 // pred_fallthru
      _
    // Predicated region
    $region34: #{tpu_custom_call.1} parent=1 // pred_check
      _
    $region35: #{tpu_custom_call.1} parent=1 // pred_check_branch
      %1751 = sbr.rel (0) target = $region37
    $region36: #{tpu_custom_call.1} parent=1 // pred_region
      %1753 = dma.done [#allocation3], 2048
    $region37: #{tpu_custom_call.1} parent=1 // pred_fallthru
      _
    %1754 = vsyncpa [#allocation3], 1

</llo_original>
